<compile_context>
chip_gen: v5e
topology: v5e:2x2
jax: 0.10.0
libtpu: 0.0.40
codegen_flags: <defaults>
</compile_context>

<pallas_src>
import math

import jax
import jax.numpy as jnp
from jax import lax
from jax.experimental import pallas as pl
from jax.experimental.pallas import tpu as pltpu

INV_SQRT_2PI = 1.0 / math.sqrt(2.0 * math.pi)
INV_SQRT_2 = 1.0 / math.sqrt(2.0)


def _erf_poly(x):
    """Abramowitz & Stegun 7.1.26 erf (max abs err ~1.5e-7). Uses only exp/mul/add/where so it
    lowers to VPU + EUP regardless of Mosaic's native erf support."""
    p = 0.3275911
    a1, a2, a3, a4, a5 = 0.254829592, -0.284496736, 1.421413741, -1.453152027, 1.061405429
    s = jnp.where(x >= 0.0, 1.0, -1.0)
    ax = jnp.abs(x)
    t = 1.0 / (1.0 + p * ax)
    poly = ((((a5 * t + a4) * t + a3) * t + a2) * t + a1) * t
    return s * (1.0 - poly * jnp.exp(-ax * ax))


def _ex_relu(mu, sigma, erf):
    """Expected ReLU of N(mu, sigma) — matches torch ex_relu semantics."""
    is_zero = sigma == 0.0
    sigma_safe = jnp.where(is_zero, 1e-10, sigma)
    rsig = lax.rsqrt(sigma_safe)                      # EUP; replaces sqrt + divide
    w = mu * rsig
    sqrt_sigma = sigma_safe * rsig                    # sqrt(sigma) without a second transcendental
    nr = sqrt_sigma * (jnp.exp(-0.5 * w * w) * INV_SQRT_2PI
                       + 0.5 * w * (1.0 + erf(w * INV_SQRT_2)))
    return jnp.where(is_zero, jnp.maximum(mu, 0.0), nr)


# --------------------------------------------------------------------------------------
# Kernel 1: per-node feature transform (TX|TC fused) + GMM responsibilities (gamma).
# --------------------------------------------------------------------------------------
def _transform_kernel(x_ref, rhs_ref, bias_ref, g_rhs_ref, g_bias_ref, txtc_ref, gamma_ref):
    x = x_ref[...]                                    # (TM1, Fin), may contain NaN
    isnan = jnp.isnan(x)
    miss = isnan.astype(jnp.float32)
    xz = jnp.where(isnan, 0.0, x)                     # observed features, 0 where missing

    # TODO(synk): training-mode dropout on the imputed mean/var matrices is skipped (eval mode).

    # Single LHS reused by both matmuls.
    lhs = jnp.concatenate([xz, miss, xz * xz], axis=1)                 # (TM1, 3*Fin)

    # Fused TX|TC: one 2*K*Fout-lane MXU matmul (bias pre-folded into the TX half).
    txtc = jnp.dot(lhs, rhs_ref[...], preferred_element_type=jnp.float32) + bias_ref[...]
    txtc_ref[...] = txtc.astype(txtc_ref.dtype)

    # Responsibilities via matmul (component-independent normalizer cancels in the softmax).
    logits = jnp.dot(lhs, g_rhs_ref[...], preferred_element_type=jnp.float32) + g_bias_ref[...]
    m = jnp.max(logits, axis=1, keepdims=True)
    e = jnp.exp(logits - m)
    gamma_ref[...] = e / jnp.sum(e, axis=1, keepdims=True)


# --------------------------------------------------------------------------------------
# Kernel 2: adjacency propagation (tiled reduction) + expected-ReLU + gamma combine.
# --------------------------------------------------------------------------------------
def _propagate_kernel(adj_ref, txtc_ref, gamma_ref, out_ref, cx_acc, cc_acc):
    kk = pl.program_id(1)
    kf = cx_acc.shape[-1]

    adj = adj_ref[...]                                # (TM, TK), compute_dtype (bf16 default)
    adj_f32 = adj.astype(jnp.float32)
    adj2 = (adj_f32 * adj_f32).astype(adj.dtype)      # square on the VPU in f32 (v5e-safe)

    dx = jnp.dot(adj, txtc_ref[:, :kf], preferred_element_type=jnp.float32)    # (TM, KF)
    dc = jnp.dot(adj2, txtc_ref[:, kf:], preferred_element_type=jnp.float32)   # (TM, KF)

    @pl.when(kk == 0)
    def _():                                          # direct write: no zero-init + add pass
        cx_acc[...] = dx
        cc_acc[...] = dc

    @pl.when(kk > 0)
    def _():
        cx_acc[...] += dx
        cc_acc[...] += dc

    @pl.when(kk == pl.num_programs(1) - 1)
    def _():
        fout = out_ref.shape[-1]
        gamma = gamma_ref[...]                        # (TM, K) f32
        K = gamma.shape[-1]
        # cc is mathematically >= 0 (adj^2, var, W^2 all nonneg); clamp guards rounding.
        ex = _ex_relu(cx_acc[...], jnp.maximum(cc_acc[...], 0.0), _erf_poly)   # (TM, K*Fout)
        acc = ex[:, 0:fout] * gamma[:, 0:1]
        for k in range(1, K):
            acc = acc + ex[:, k * fout:(k + 1) * fout] * gamma[:, k:k + 1]
        out_ref[...] = acc.astype(out_ref.dtype)


def _round_up(a, b):
    return ((a + b - 1) // b) * b


def _pick_row_tile(n, cap=2048):
    """Largest multiple of 8 <= cap that divides n (n is always a multiple of 8 here)."""
    if n <= cap:
        return n
    d = (cap // 8) * 8
    while d > 8 and n % d:
        d -= 8
    return d


def gcnmf_forward(x, adj, weight, bias, logp, means, logvars, *,
                  tm=None, tk=None, compute_dtype=jnp.bfloat16):
    N, fin = x.shape
    fout = weight.shape[1]
    K = means.shape[0]
    kf = K * fout

    # ---- kernel-2 tile selection: tm == tk avoids lcm over-padding; sweep 512..1024 ----------
    if tm is None or tk is None:
        if N <= 1024:
            tm = tk = _round_up(N, 128)     # single lane-dense tile
        elif N <= 4096:
            tm = tk = 512
        else:
            tm = tk = 1024                  # ~7 MiB VMEM in bf16 — safe on v5e/v6e/v7x
    n_pad = _round_up(N, math.lcm(tm, tk))
    tm1 = _pick_row_tile(n_pad)             # kernel-1 row tile (few bytes/step => big tile)

    # ---- pad node dimension so the tiles divide it evenly ------------------------------------
    x = x.astype(jnp.float32)
    if x.shape[0] != n_pad:
        x = jnp.pad(x, ((0, n_pad - N), (0, 0)))               # padded rows: observed zeros
    # Prefer preparing the padded, compute_dtype adjacency ONCE outside the step function and
    # passing it in; this path only runs when that hasn't been done.
    if adj.shape[0] != n_pad or adj.dtype != compute_dtype:
        pad_a = n_pad - adj.shape[0]
        adj = jnp.pad(adj.astype(compute_dtype), ((0, pad_a), (0, pad_a)))

    # ---- small parameter-derived operands (precomputed once, reused by every tile) -----------
    variances = jnp.exp(logvars)                                # (K, Fin)
    inv_var = 1.0 / variances
    w_sq = weight * weight
    # w_stack[:, k*Fout:(k+1)*Fout] = means[k][:, None] * W ; v_stack analogous with var * W^2.
    w_stack = (means[:, :, None] * weight[None, :, :]).transpose(1, 0, 2).reshape(fin, kf)
    v_stack = (variances[:, :, None] * w_sq[None, :, :]).transpose(1, 0, 2).reshape(fin, kf)
    w_tile = jnp.tile(weight, (1, K))                           # (Fin, K*Fout) = [W W ... W]
    zeros_kf = jnp.zeros((fin, kf), jnp.float32)
    rhs_txtc = jnp.concatenate([
        jnp.concatenate([w_tile, zeros_kf], axis=1),            # xz   rows -> TX only
        jnp.concatenate([w_stack, v_stack], axis=1),            # miss rows -> TX and TC
        jnp.zeros((fin, 2 * kf), jnp.float32),                  # xz^2 rows (only used by gamma)
    ], axis=0)                                                  # (3*Fin, 2*K*Fout)
    bias_row = jnp.concatenate([jnp.tile(bias.reshape(1, fout), (1, K)),
                                jnp.zeros((1, kf), jnp.float32)], axis=1)      # (1, 2*K*Fout)

    mu_iv = means * inv_var                                     # (K, Fin)
    mu2_iv = means * means * inv_var
    g_rhs = jnp.concatenate([mu_iv.T, 0.5 * mu2_iv.T, -0.5 * inv_var.T], axis=0)   # (3*Fin, K)
    g_bias = (logp - 0.5 * jnp.sum(mu2_iv, axis=1)).reshape(1, K)                  # (1, K)

    # ---- kernel 1: fused feature transform + responsibilities --------------------------------
    txtc, gamma = pl.pallas_call(
        _transform_kernel,
        out_shape=(
            jax.ShapeDtypeStruct((n_pad, 2 * kf), compute_dtype),
            jax.ShapeDtypeStruct((n_pad, K), jnp.float32),
        ),
        grid=(n_pad // tm1,),
        in_specs=[
            pl.BlockSpec((tm1, fin), lambda i: (i, 0)),
            pl.BlockSpec((3 * fin, 2 * kf), lambda i: (0, 0)),
            pl.BlockSpec((1, 2 * kf), lambda i: (0, 0)),
            pl.BlockSpec((3 * fin, K), lambda i: (0, 0)),
            pl.BlockSpec((1, K), lambda i: (0, 0)),
        ],
        out_specs=(
            pl.BlockSpec((tm1, 2 * kf), lambda i: (i, 0)),
            pl.BlockSpec((tm1, K), lambda i: (i, 0)),
        ),
        compiler_params=pltpu.CompilerParams(dimension_semantics=("parallel",)),
    )(x, rhs_txtc, bias_row, g_rhs, g_bias)

    # ---- kernel 2: tiled adjacency propagation + combine --------------------------------------
    out = pl.pallas_call(
        _propagate_kernel,
        out_shape=jax.ShapeDtypeStruct((n_pad, fout), jnp.float32),
        grid=(n_pad // tm, n_pad // tk),
        in_specs=[
            pl.BlockSpec((tm, tk), lambda i, k: (i, k)),
            pl.BlockSpec((tk, 2 * kf), lambda i, k: (k, 0)),
            pl.BlockSpec((tm, K), lambda i, k: (i, 0)),
        ],
        out_specs=pl.BlockSpec((tm, fout), lambda i, k: (i, 0)),
        scratch_shapes=[
            pltpu.VMEM((tm, kf), jnp.float32),
            pltpu.VMEM((tm, kf), jnp.float32),
        ],
        compiler_params=pltpu.CompilerParams(
            dimension_semantics=("parallel", "arbitrary")),
    )(adj, txtc, gamma)

    return out[:N]


# ----------------------- pure-JAX reference (for checking) -----------------------
def gcnmf_reference(x, adj, weight, bias, logp, means, logvars):
    Fin = x.shape[1]
    variances = jnp.exp(logvars)
    x_isnan = jnp.isnan(x)[None]                                   # (1, N, Fin)
    mean_mat = jnp.where(x_isnan, means[:, None, :], x[None])      # (K, N, Fin)
    var_mat = jnp.where(x_isnan, variances[:, None, :], 0.0)       # (K, N, Fin)
    tx = jnp.einsum('knf,fo->kno', mean_mat, weight) + bias
    tc = jnp.einsum('knf,fo->kno', var_mat, weight * weight)
    adj2 = adj * adj
    cx = jnp.einsum('nm,kmo->kno', adj, tx)
    cc = jnp.einsum('nm,kmo->kno', adj2, tc)
    ex = _ex_relu(cx, cc, lax.erf)
    log_n = (-0.5 * jnp.sum((mean_mat - means[:, None, :]) ** 2
                            / variances[:, None, :], axis=2)
             - Fin / 2.0 * math.log(2.0 * math.pi)
             - 0.5 * jnp.sum(logvars))
    log_prob = logp[:, None] + log_n                               # (K, N)
    gamma = jax.nn.softmax(log_prob, axis=0)
    return jnp.sum(ex * gamma[:, :, None], axis=0)


if __name__ == "__main__":
    key = jax.random.PRNGKey(0)
    # K * F_OUT = 128 -> the propagation accumulators are exactly one lane-dense MXU tile.
    N, F_IN, F_OUT, K = 300, 24, 32, 4

    k_x, k_nan, k_adj, k_w, k_mu, k_lv = jax.random.split(key, 6)

    # node features with ~30% missing entries (NaN)
    x_dense = jax.random.normal(k_x, (N, F_IN), dtype=jnp.float32)
    nan_mask = jax.random.bernoulli(k_nan, 0.3, (N, F_IN))
    x = jnp.where(nan_mask, jnp.float32(jnp.nan), x_dense)

    # dense adjacency (binary, with self-loops)
    adj = jax.random.bernoulli(k_adj, 0.05, (N, N)).astype(jnp.float32)
    adj = jnp.maximum(adj, jnp.eye(N, dtype=jnp.float32))

    # deterministic parameter init (shapes from GCNmfConv.__init__)
    gain = 1.414
    bound = gain * math.sqrt(6.0 / (F_IN + F_OUT))
    weight = jax.random.uniform(k_w, (F_IN, F_OUT), jnp.float32, -bound, bound)
    bias = jnp.zeros((F_OUT,), jnp.float32)
    logp = jnp.log(jnp.full((K,), 1.0 / K, jnp.float32))
    means = 0.5 * jax.random.normal(k_mu, (K, F_IN), dtype=jnp.float32)
    logvars = 0.1 * jax.random.normal(k_lv, (K, F_IN), dtype=jnp.float32)

    ref = gcnmf_reference(x, adj, weight, bias, logp, means, logvars)

    # 1) f32 path with explicit small tiles (multi row + reduction tiles, N padded 300 -> 384):
    #    validates the kernel math tightly against the reference.
    out_f32 = jax.block_until_ready(
        gcnmf_forward(x, adj, weight, bias, logp, means, logvars,
                      tm=64, tk=128, compute_dtype=jnp.float32))
    assert out_f32.shape == (N, F_OUT)
    assert jnp.all(jnp.isfinite(out_f32))
    assert jnp.allclose(out_f32, ref, rtol=1e-3, atol=1e-3), \
        f"f32 max abs err = {jnp.max(jnp.abs(out_f32 - ref))}"

    # 2) default path: bf16 adj / TX / TC with f32 accumulation, auto (single-tile) tiling.
    out_bf16 = jax.block_until_ready(
        gcnmf_forward(x, adj, weight, bias, logp, means, logvars))
    assert out_bf16.shape == (N, F_OUT)
    assert jnp.all(jnp.isfinite(out_bf16))
    assert jnp.allclose(out_bf16, ref, rtol=5e-2, atol=5e-2), \
        f"bf16 max abs err = {jnp.max(jnp.abs(out_bf16 - ref))}"

    print("KERNEL_OK")
</pallas_src>

<mosaic_0001>
module attributes {stable_mosaic.version = 11 : i64} {
  func.func @_transform_kernel(%arg0: i32, %arg1: memref<384x24xf32, #tpu.memory_space<vmem>>, %arg2: memref<72x256xf32, #tpu.memory_space<vmem>>, %arg3: memref<1x256xf32, #tpu.memory_space<vmem>>, %arg4: memref<72x4xf32, #tpu.memory_space<vmem>>, %arg5: memref<1x4xf32, #tpu.memory_space<vmem>>, %arg6: memref<384x256xf32, #tpu.memory_space<vmem>>, %arg7: memref<384x4xf32, #tpu.memory_space<vmem>>) attributes {dimension_semantics = [#tpu.dimension_semantics<parallel>], iteration_bounds = array<i64: 1>, scalar_prefetch = 0 : i64, scratch_operands = 0 : i64, tpu.core_type = #tpu.core_type<tc>, window_params = [{transform_indices = @transform_0, window_bounds = array<i64: 384, 24>}, {pipeline_mode = #tpu.pipeline_mode<synchronous>, transform_indices = @transform_1, window_bounds = array<i64: 72, 256>}, {pipeline_mode = #tpu.pipeline_mode<synchronous>, transform_indices = @transform_2, window_bounds = array<i64: 1, 256>}, {pipeline_mode = #tpu.pipeline_mode<synchronous>, transform_indices = @transform_3, window_bounds = array<i64: 72, 4>}, {pipeline_mode = #tpu.pipeline_mode<synchronous>, transform_indices = @transform_4, window_bounds = array<i64: 1, 4>}, {transform_indices = @transform_5, window_bounds = array<i64: 384, 256>}, {transform_indices = @transform_6, window_bounds = array<i64: 384, 4>}]} {
    %c0 = arith.constant 0 : index
    %c0_0 = arith.constant 0 : index
    %0 = vector.load %arg1[%c0, %c0_0] : memref<384x24xf32, #tpu.memory_space<vmem>>, vector<384x24xf32>
    %1 = arith.cmpf one, %0, %0 : vector<384x24xf32>
    %2 = arith.extui %1 : vector<384x24xi1> to vector<384x24xi32>
    %3 = arith.sitofp %2 : vector<384x24xi32> to vector<384x24xf32>
    %cst = arith.constant 0.000000e+00 : f32
    %4 = vector.broadcast %cst : f32 to vector<384x24xf32>
    %5 = arith.select %1, %4, %0 : vector<384x24xi1>, vector<384x24xf32>
    %6 = arith.mulf %5, %5 : vector<384x24xf32>
    %7 = tpu.concatenate %5, %3, %6 in 1 : vector<384x24xf32>, vector<384x24xf32>, vector<384x24xf32> -> vector<384x72xf32>
    %c0_1 = arith.constant 0 : index
    %c0_2 = arith.constant 0 : index
    %8 = vector.load %arg2[%c0_1, %c0_2] : memref<72x256xf32, #tpu.memory_space<vmem>>, vector<72x256xf32>
    %cst_3 = arith.constant dense<0.000000e+00> : vector<384x256xf32>
    %9 = tpu.matmul %7, %8, %cst_3 {dimension_numbers = #tpu.dot_dimension_numbers<[1], [0], [0], [1], [0, 0, 1, 1], [], []>} : vector<384x72xf32>, vector<72x256xf32>, vector<384x256xf32> -> vector<384x256xf32>
    %c0_4 = arith.constant 0 : index
    %c0_5 = arith.constant 0 : index
    %10 = vector.load %arg3[%c0_4, %c0_5] : memref<1x256xf32, #tpu.memory_space<vmem>>, vector<1x256xf32>
    %11 = vector.broadcast %10 : vector<1x256xf32> to vector<384x256xf32>
    %12 = arith.addf %9, %11 : vector<384x256xf32>
    %c0_6 = arith.constant 0 : index
    %c0_7 = arith.constant 0 : index
    %13 = vector.load %arg6[%c0_6, %c0_7] : memref<384x256xf32, #tpu.memory_space<vmem>>, vector<384x256xf32>
    tpu.vector_store %arg6[%c0_6, %c0_7], %12 {strides = array<i32>} : memref<384x256xf32, #tpu.memory_space<vmem>>, vector<384x256xf32>,
    %c0_8 = arith.constant 0 : index
    %c0_9 = arith.constant 0 : index
    %14 = vector.load %arg4[%c0_8, %c0_9] : memref<72x4xf32, #tpu.memory_space<vmem>>, vector<72x4xf32>
    %cst_10 = arith.constant dense<0.000000e+00> : vector<384x4xf32>
    %15 = tpu.matmul %7, %14, %cst_10 {dimension_numbers = #tpu.dot_dimension_numbers<[1], [0], [0], [1], [0, 0, 1, 1], [], []>} : vector<384x72xf32>, vector<72x4xf32>, vector<384x4xf32> -> vector<384x4xf32>
    %c0_11 = arith.constant 0 : index
    %c0_12 = arith.constant 0 : index
    %16 = vector.load %arg5[%c0_11, %c0_12] : memref<1x4xf32, #tpu.memory_space<vmem>>, vector<1x4xf32>
    %17 = vector.broadcast %16 : vector<1x4xf32> to vector<384x4xf32>
    %18 = arith.addf %15, %17 : vector<384x4xf32>
    %cst_13 = arith.constant dense<0xFF800000> : vector<384xf32>
    %19 = vector.multi_reduction <maximumf>, %18, %cst_13 [1] : vector<384x4xf32> to vector<384xf32>
    %20 = vector.shape_cast %19 : vector<384xf32> to vector<384x1xf32>
    %21 = vector.broadcast %20 : vector<384x1xf32> to vector<384x4xf32>
    %22 = arith.subf %18, %21 : vector<384x4xf32>
    %23 = math.exp %22 : vector<384x4xf32>
    %cst_14 = arith.constant dense<0.000000e+00> : vector<384xf32>
    %24 = vector.multi_reduction <add>, %23, %cst_14 [1] : vector<384x4xf32> to vector<384xf32>
    %25 = vector.shape_cast %24 : vector<384xf32> to vector<384x1xf32>
    %26 = vector.broadcast %25 : vector<384x1xf32> to vector<384x4xf32>
    %27 = arith.divf %23, %26 : vector<384x4xf32>
    %c0_15 = arith.constant 0 : index
    %c0_16 = arith.constant 0 : index
    %28 = vector.load %arg7[%c0_15, %c0_16] : memref<384x4xf32, #tpu.memory_space<vmem>>, vector<384x4xf32>
    tpu.vector_store %arg7[%c0_15, %c0_16], %27 {strides = array<i32>} : memref<384x4xf32, #tpu.memory_space<vmem>>, vector<384x4xf32>,
    return
  }
  func.func @transform_0(%arg0: i32) -> (i32, i32) {
    %c0_i32 = arith.constant 0 : i32
    %c0_i32_0 = arith.constant 0 : i32
    return %arg0, %c0_i32 : i32, i32
  }
  func.func @transform_1(%arg0: i32) -> (i32, i32) {
    %c0_i32 = arith.constant 0 : i32
    %c0_i32_0 = arith.constant 0 : i32
    %c0_i32_1 = arith.constant 0 : i32
    return %c0_i32, %c0_i32_0 : i32, i32
  }
  func.func @transform_2(%arg0: i32) -> (i32, i32) {
    %c0_i32 = arith.constant 0 : i32
    %c0_i32_0 = arith.constant 0 : i32
    %c0_i32_1 = arith.constant 0 : i32
    return %c0_i32, %c0_i32_0 : i32, i32
  }
  func.func @transform_3(%arg0: i32) -> (i32, i32) {
    %c0_i32 = arith.constant 0 : i32
    %c0_i32_0 = arith.constant 0 : i32
    %c0_i32_1 = arith.constant 0 : i32
    return %c0_i32, %c0_i32_0 : i32, i32
  }
  func.func @transform_4(%arg0: i32) -> (i32, i32) {
    %c0_i32 = arith.constant 0 : i32
    %c0_i32_0 = arith.constant 0 : i32
    %c0_i32_1 = arith.constant 0 : i32
    return %c0_i32, %c0_i32_0 : i32, i32
  }
  func.func @transform_5(%arg0: i32) -> (i32, i32) {
    %c0_i32 = arith.constant 0 : i32
    %c0_i32_0 = arith.constant 0 : i32
    return %arg0, %c0_i32 : i32, i32
  }
  func.func @transform_6(%arg0: i32) -> (i32, i32) {
    %c0_i32 = arith.constant 0 : i32
    %c0_i32_0 = arith.constant 0 : i32
    return %arg0, %c0_i32 : i32, i32
  }
}

</mosaic_0001>

<llo_original>
// kernel: tpu_custom_call.1
$region0: #{tpu_custom_call.1}
  #allocation0 [shape = 'u32[]', space=smem, size = 0x4, offset = 0x4, fixed_abs, tag = 'smem constant byte address 0x4 - core index']
  #allocation1 [shape = 'u32[72,128]{1,0:T(1,128)}', space=vmem, size = 0x9000, scoped, tag = 'internal scratch']
  %s0 = inlined_call_operand.vmem [shape: f32[384,24], index: 0, kind: input, shape index: {}]
  %s1 = inlined_call_operand.vmem [shape: f32[72,256], index: 1, kind: input, shape index: {}]
  %s2 = inlined_call_operand.vmem [shape: f32[1,256], index: 2, kind: input, shape index: {}]
  %s3 = inlined_call_operand.vmem [shape: f32[72,4], index: 3, kind: input, shape index: {}]
  %s4 = inlined_call_operand.vmem [shape: f32[1,4], index: 4, kind: input, shape index: {}]
  %s5 = inlined_call_operand.hbm [shape: f32[384,256], index: 5, kind: output, shape index: {0}]
  %s6 = inlined_call_operand.vmem [shape: f32[384,4], index: 6, kind: output, shape index: {1}]
  %7 = xla_tuple %s5, %s6
  %s8 = sld [smem:[#allocation0]]
  $region38: #{tpu_custom_call.1} parent=0
    _
  %s10 = ssub.s32 1, %s8
  %s11 = scalar_select 0, %s10, %s8
  $region1: #{tpu_custom_call.1} parent=0
    #allocation2 [shape = 'u8[393216]{0}', space=vmem, size = 0x60000, scoped, tag = 'output window, operand 0, single buffered']
    #allocation3 [shape = 's32[1]{0}', space=sflag, size = 0x4, scoped, tag = 'scoped memory for tpu_custom_call.1']
    %12 = vsyncpa [#allocation3], 0
    // Predicated region
    $region2: #{tpu_custom_call.1} parent=1 // pred_check
      _
    $region3: #{tpu_custom_call.1} parent=1 // pred_check_branch
      %14 = sbr.rel (0) target = $region5
    $region4: #{tpu_custom_call.1} parent=1 // pred_region
      _
    $region5: #{tpu_custom_call.1} parent=1 // pred_fallthru
      _
    // Predicated region
    $region6: #{tpu_custom_call.1} parent=1 // pred_check
      _
    $region7: #{tpu_custom_call.1} parent=1 // pred_check_branch
      %16 = sbr.rel (0) target = $region9
    $region8: #{tpu_custom_call.1} parent=1 // pred_region
      _
    $region9: #{tpu_custom_call.1} parent=1 // pred_fallthru
      _
    // Predicated region
    $region10: #{tpu_custom_call.1} parent=1 // pred_check
      _
    $region11: #{tpu_custom_call.1} parent=1 // pred_check_branch
      %18 = sbr.rel (0) target = $region13
    $region12: #{tpu_custom_call.1} parent=1 // pred_region
      _
    $region13: #{tpu_custom_call.1} parent=1 // pred_fallthru
      _
    // Predicated region
    $region14: #{tpu_custom_call.1} parent=1 // pred_check
      _
    $region15: #{tpu_custom_call.1} parent=1 // pred_check_branch
      %20 = sbr.rel (0) target = $region17
    $region16: #{tpu_custom_call.1} parent=1 // pred_region
      _
    $region17: #{tpu_custom_call.1} parent=1 // pred_fallthru
      _
    // Predicated region
    $region18: #{tpu_custom_call.1} parent=1 // pred_check
      _
    $region19: #{tpu_custom_call.1} parent=1 // pred_check_branch
      %22 = sbr.rel (0) target = $region21
    $region20: #{tpu_custom_call.1} parent=1 // pred_region
      _
    $region21: #{tpu_custom_call.1} parent=1 // pred_fallthru
      _
    %v23 = vld [vmem:[%s0] sm:$0xff]
    %v24 = vld [vmem:[%s0 + $0x8] sm:$0xff]
    %v25 = vld [vmem:[%s0 + $0x10] sm:$0xff]
    %v26 = vld [vmem:[%s0 + $0x18] sm:$0xff]
    %v27 = vld [vmem:[%s0 + $0x20] sm:$0xff]
    %v28 = vld [vmem:[%s0 + $0x28] sm:$0xff]
    %v29 = vld [vmem:[%s0 + $0x30] sm:$0xff]
    %v30 = vld [vmem:[%s0 + $0x38] sm:$0xff]
    %v31 = vld [vmem:[%s0 + $0x40] sm:$0xff]
    %v32 = vld [vmem:[%s0 + $0x48] sm:$0xff]
    %v33 = vld [vmem:[%s0 + $0x50] sm:$0xff]
    %v34 = vld [vmem:[%s0 + $0x58] sm:$0xff]
    %v35 = vld [vmem:[%s0 + $0x60] sm:$0xff]
    %v36 = vld [vmem:[%s0 + $0x68] sm:$0xff]
    %v37 = vld [vmem:[%s0 + $0x70] sm:$0xff]
    %v38 = vld [vmem:[%s0 + $0x78] sm:$0xff]
    %v39 = vld [vmem:[%s0 + $0x80] sm:$0xff]
    %v40 = vld [vmem:[%s0 + $0x88] sm:$0xff]
    %v41 = vld [vmem:[%s0 + $0x90] sm:$0xff]
    %v42 = vld [vmem:[%s0 + $0x98] sm:$0xff]
    %v43 = vld [vmem:[%s0 + $0xa0] sm:$0xff]
    %v44 = vld [vmem:[%s0 + $0xa8] sm:$0xff]
    %v45 = vld [vmem:[%s0 + $0xb0] sm:$0xff]
    %v46 = vld [vmem:[%s0 + $0xb8] sm:$0xff]
    %v47 = vld [vmem:[%s0 + $0xc0] sm:$0xff]
    %v48 = vld [vmem:[%s0 + $0xc8] sm:$0xff]
    %v49 = vld [vmem:[%s0 + $0xd0] sm:$0xff]
    %v50 = vld [vmem:[%s0 + $0xd8] sm:$0xff]
    %v51 = vld [vmem:[%s0 + $0xe0] sm:$0xff]
    %v52 = vld [vmem:[%s0 + $0xe8] sm:$0xff]
    %v53 = vld [vmem:[%s0 + $0xf0] sm:$0xff]
    %v54 = vld [vmem:[%s0 + $0xf8] sm:$0xff]
    %v55 = vld [vmem:[%s0 + $0x100] sm:$0xff]
    %v56 = vld [vmem:[%s0 + $0x108] sm:$0xff]
    %v57 = vld [vmem:[%s0 + $0x110] sm:$0xff]
    %v58 = vld [vmem:[%s0 + $0x118] sm:$0xff]
    %v59 = vld [vmem:[%s0 + $0x120] sm:$0xff]
    %v60 = vld [vmem:[%s0 + $0x128] sm:$0xff]
    %v61 = vld [vmem:[%s0 + $0x130] sm:$0xff]
    %v62 = vld [vmem:[%s0 + $0x138] sm:$0xff]
    %v63 = vld [vmem:[%s0 + $0x140] sm:$0xff]
    %v64 = vld [vmem:[%s0 + $0x148] sm:$0xff]
    %v65 = vld [vmem:[%s0 + $0x150] sm:$0xff]
    %v66 = vld [vmem:[%s0 + $0x158] sm:$0xff]
    %v67 = vld [vmem:[%s0 + $0x160] sm:$0xff]
    %v68 = vld [vmem:[%s0 + $0x168] sm:$0xff]
    %v69 = vld [vmem:[%s0 + $0x170] sm:$0xff]
    %v70 = vld [vmem:[%s0 + $0x178] sm:$0xff]
    %vm71 = vcmp.ne.f32.partialorder %v23, %v23
    %vm72 = vcmp.ne.f32.partialorder %v24, %v24
    %vm73 = vcmp.ne.f32.partialorder %v25, %v25
    %vm74 = vcmp.ne.f32.partialorder %v26, %v26
    %vm75 = vcmp.ne.f32.partialorder %v27, %v27
    %vm76 = vcmp.ne.f32.partialorder %v28, %v28
    %vm77 = vcmp.ne.f32.partialorder %v29, %v29
    %vm78 = vcmp.ne.f32.partialorder %v30, %v30
    %vm79 = vcmp.ne.f32.partialorder %v31, %v31
    %vm80 = vcmp.ne.f32.partialorder %v32, %v32
    %vm81 = vcmp.ne.f32.partialorder %v33, %v33
    %vm82 = vcmp.ne.f32.partialorder %v34, %v34
    %vm83 = vcmp.ne.f32.partialorder %v35, %v35
    %vm84 = vcmp.ne.f32.partialorder %v36, %v36
    %vm85 = vcmp.ne.f32.partialorder %v37, %v37
    %vm86 = vcmp.ne.f32.partialorder %v38, %v38
    %vm87 = vcmp.ne.f32.partialorder %v39, %v39
    %vm88 = vcmp.ne.f32.partialorder %v40, %v40
    %vm89 = vcmp.ne.f32.partialorder %v41, %v41
    %vm90 = vcmp.ne.f32.partialorder %v42, %v42
    %vm91 = vcmp.ne.f32.partialorder %v43, %v43
    %vm92 = vcmp.ne.f32.partialorder %v44, %v44
    %vm93 = vcmp.ne.f32.partialorder %v45, %v45
    %vm94 = vcmp.ne.f32.partialorder %v46, %v46
    %vm95 = vcmp.ne.f32.partialorder %v47, %v47
    %vm96 = vcmp.ne.f32.partialorder %v48, %v48
    %vm97 = vcmp.ne.f32.partialorder %v49, %v49
    %vm98 = vcmp.ne.f32.partialorder %v50, %v50
    %vm99 = vcmp.ne.f32.partialorder %v51, %v51
    %vm100 = vcmp.ne.f32.partialorder %v52, %v52
    %vm101 = vcmp.ne.f32.partialorder %v53, %v53
    %vm102 = vcmp.ne.f32.partialorder %v54, %v54
    %vm103 = vcmp.ne.f32.partialorder %v55, %v55
    %vm104 = vcmp.ne.f32.partialorder %v56, %v56
    %vm105 = vcmp.ne.f32.partialorder %v57, %v57
    %vm106 = vcmp.ne.f32.partialorder %v58, %v58
    %vm107 = vcmp.ne.f32.partialorder %v59, %v59
    %vm108 = vcmp.ne.f32.partialorder %v60, %v60
    %vm109 = vcmp.ne.f32.partialorder %v61, %v61
    %vm110 = vcmp.ne.f32.partialorder %v62, %v62
    %vm111 = vcmp.ne.f32.partialorder %v63, %v63
    %vm112 = vcmp.ne.f32.partialorder %v64, %v64
    %vm113 = vcmp.ne.f32.partialorder %v65, %v65
    %vm114 = vcmp.ne.f32.partialorder %v66, %v66
    %vm115 = vcmp.ne.f32.partialorder %v67, %v67
    %vm116 = vcmp.ne.f32.partialorder %v68, %v68
    %vm117 = vcmp.ne.f32.partialorder %v69, %v69
    %vm118 = vcmp.ne.f32.partialorder %v70, %v70
    %v119 = vsel %vm71, 1, 0
    %v120 = vsel %vm72, 1, 0
    %v121 = vsel %vm73, 1, 0
    %v122 = vsel %vm74, 1, 0
    %v123 = vsel %vm75, 1, 0
    %v124 = vsel %vm76, 1, 0
    %v125 = vsel %vm77, 1, 0
    %v126 = vsel %vm78, 1, 0
    %v127 = vsel %vm79, 1, 0
    %v128 = vsel %vm80, 1, 0
    %v129 = vsel %vm81, 1, 0
    %v130 = vsel %vm82, 1, 0
    %v131 = vsel %vm83, 1, 0
    %v132 = vsel %vm84, 1, 0
    %v133 = vsel %vm85, 1, 0
    %v134 = vsel %vm86, 1, 0
    %v135 = vsel %vm87, 1, 0
    %v136 = vsel %vm88, 1, 0
    %v137 = vsel %vm89, 1, 0
    %v138 = vsel %vm90, 1, 0
    %v139 = vsel %vm91, 1, 0
    %v140 = vsel %vm92, 1, 0
    %v141 = vsel %vm93, 1, 0
    %v142 = vsel %vm94, 1, 0
    %v143 = vsel %vm95, 1, 0
    %v144 = vsel %vm96, 1, 0
    %v145 = vsel %vm97, 1, 0
    %v146 = vsel %vm98, 1, 0
    %v147 = vsel %vm99, 1, 0
    %v148 = vsel %vm100, 1, 0
    %v149 = vsel %vm101, 1, 0
    %v150 = vsel %vm102, 1, 0
    %v151 = vsel %vm103, 1, 0
    %v152 = vsel %vm104, 1, 0
    %v153 = vsel %vm105, 1, 0
    %v154 = vsel %vm106, 1, 0
    %v155 = vsel %vm107, 1, 0
    %v156 = vsel %vm108, 1, 0
    %v157 = vsel %vm109, 1, 0
    %v158 = vsel %vm110, 1, 0
    %v159 = vsel %vm111, 1, 0
    %v160 = vsel %vm112, 1, 0
    %v161 = vsel %vm113, 1, 0
    %v162 = vsel %vm114, 1, 0
    %v163 = vsel %vm115, 1, 0
    %v164 = vsel %vm116, 1, 0
    %v165 = vsel %vm117, 1, 0
    %v166 = vsel %vm118, 1, 0
    %v167 = vcvt.s32.f32 %v119
    %v168 = vcvt.s32.f32 %v120
    %v169 = vcvt.s32.f32 %v121
    %v170 = vcvt.s32.f32 %v122
    %v171 = vcvt.s32.f32 %v123
    %v172 = vcvt.s32.f32 %v124
    %v173 = vcvt.s32.f32 %v125
    %v174 = vcvt.s32.f32 %v126
    %v175 = vcvt.s32.f32 %v127
    %v176 = vcvt.s32.f32 %v128
    %v177 = vcvt.s32.f32 %v129
    %v178 = vcvt.s32.f32 %v130
    %v179 = vcvt.s32.f32 %v131
    %v180 = vcvt.s32.f32 %v132
    %v181 = vcvt.s32.f32 %v133
    %v182 = vcvt.s32.f32 %v134
    %v183 = vcvt.s32.f32 %v135
    %v184 = vcvt.s32.f32 %v136
    %v185 = vcvt.s32.f32 %v137
    %v186 = vcvt.s32.f32 %v138
    %v187 = vcvt.s32.f32 %v139
    %v188 = vcvt.s32.f32 %v140
    %v189 = vcvt.s32.f32 %v141
    %v190 = vcvt.s32.f32 %v142
    %v191 = vcvt.s32.f32 %v143
    %v192 = vcvt.s32.f32 %v144
    %v193 = vcvt.s32.f32 %v145
    %v194 = vcvt.s32.f32 %v146
    %v195 = vcvt.s32.f32 %v147
    %v196 = vcvt.s32.f32 %v148
    %v197 = vcvt.s32.f32 %v149
    %v198 = vcvt.s32.f32 %v150
    %v199 = vcvt.s32.f32 %v151
    %v200 = vcvt.s32.f32 %v152
    %v201 = vcvt.s32.f32 %v153
    %v202 = vcvt.s32.f32 %v154
    %v203 = vcvt.s32.f32 %v155
    %v204 = vcvt.s32.f32 %v156
    %v205 = vcvt.s32.f32 %v157
    %v206 = vcvt.s32.f32 %v158
    %v207 = vcvt.s32.f32 %v159
    %v208 = vcvt.s32.f32 %v160
    %v209 = vcvt.s32.f32 %v161
    %v210 = vcvt.s32.f32 %v162
    %v211 = vcvt.s32.f32 %v163
    %v212 = vcvt.s32.f32 %v164
    %v213 = vcvt.s32.f32 %v165
    %v214 = vcvt.s32.f32 %v166
    %v215 = vsel %vm71, 0.0, %v23
    %v216 = vsel %vm72, 0.0, %v24
    %v217 = vsel %vm73, 0.0, %v25
    %v218 = vsel %vm74, 0.0, %v26
    %v219 = vsel %vm75, 0.0, %v27
    %v220 = vsel %vm76, 0.0, %v28
    %v221 = vsel %vm77, 0.0, %v29
    %v222 = vsel %vm78, 0.0, %v30
    %v223 = vsel %vm79, 0.0, %v31
    %v224 = vsel %vm80, 0.0, %v32
    %v225 = vsel %vm81, 0.0, %v33
    %v226 = vsel %vm82, 0.0, %v34
    %v227 = vsel %vm83, 0.0, %v35
    %v228 = vsel %vm84, 0.0, %v36
    %v229 = vsel %vm85, 0.0, %v37
    %v230 = vsel %vm86, 0.0, %v38
    %v231 = vsel %vm87, 0.0, %v39
    %v232 = vsel %vm88, 0.0, %v40
    %v233 = vsel %vm89, 0.0, %v41
    %v234 = vsel %vm90, 0.0, %v42
    %v235 = vsel %vm91, 0.0, %v43
    %v236 = vsel %vm92, 0.0, %v44
    %v237 = vsel %vm93, 0.0, %v45
    %v238 = vsel %vm94, 0.0, %v46
    %v239 = vsel %vm95, 0.0, %v47
    %v240 = vsel %vm96, 0.0, %v48
    %v241 = vsel %vm97, 0.0, %v49
    %v242 = vsel %vm98, 0.0, %v50
    %v243 = vsel %vm99, 0.0, %v51
    %v244 = vsel %vm100, 0.0, %v52
    %v245 = vsel %vm101, 0.0, %v53
    %v246 = vsel %vm102, 0.0, %v54
    %v247 = vsel %vm103, 0.0, %v55
    %v248 = vsel %vm104, 0.0, %v56
    %v249 = vsel %vm105, 0.0, %v57
    %v250 = vsel %vm106, 0.0, %v58
    %v251 = vsel %vm107, 0.0, %v59
    %v252 = vsel %vm108, 0.0, %v60
    %v253 = vsel %vm109, 0.0, %v61
    %v254 = vsel %vm110, 0.0, %v62
    %v255 = vsel %vm111, 0.0, %v63
    %v256 = vsel %vm112, 0.0, %v64
    %v257 = vsel %vm113, 0.0, %v65
    %v258 = vsel %vm114, 0.0, %v66
    %v259 = vsel %vm115, 0.0, %v67
    %v260 = vsel %vm116, 0.0, %v68
    %v261 = vsel %vm117, 0.0, %v69
    %v262 = vsel %vm118, 0.0, %v70
    %v263 = vmul.f32 %v215, %v215
    %v264 = vmul.f32 %v216, %v216
    %v265 = vmul.f32 %v217, %v217
    %v266 = vmul.f32 %v218, %v218
    %v267 = vmul.f32 %v219, %v219
    %v268 = vmul.f32 %v220, %v220
    %v269 = vmul.f32 %v221, %v221
    %v270 = vmul.f32 %v222, %v222
    %v271 = vmul.f32 %v223, %v223
    %v272 = vmul.f32 %v224, %v224
    %v273 = vmul.f32 %v225, %v225
    %v274 = vmul.f32 %v226, %v226
    %v275 = vmul.f32 %v227, %v227
    %v276 = vmul.f32 %v228, %v228
    %v277 = vmul.f32 %v229, %v229
    %v278 = vmul.f32 %v230, %v230
    %v279 = vmul.f32 %v231, %v231
    %v280 = vmul.f32 %v232, %v232
    %v281 = vmul.f32 %v233, %v233
    %v282 = vmul.f32 %v234, %v234
    %v283 = vmul.f32 %v235, %v235
    %v284 = vmul.f32 %v236, %v236
    %v285 = vmul.f32 %v237, %v237
    %v286 = vmul.f32 %v238, %v238
    %v287 = vmul.f32 %v239, %v239
    %v288 = vmul.f32 %v240, %v240
    %v289 = vmul.f32 %v241, %v241
    %v290 = vmul.f32 %v242, %v242
    %v291 = vmul.f32 %v243, %v243
    %v292 = vmul.f32 %v244, %v244
    %v293 = vmul.f32 %v245, %v245
    %v294 = vmul.f32 %v246, %v246
    %v295 = vmul.f32 %v247, %v247
    %v296 = vmul.f32 %v248, %v248
    %v297 = vmul.f32 %v249, %v249
    %v298 = vmul.f32 %v250, %v250
    %v299 = vmul.f32 %v251, %v251
    %v300 = vmul.f32 %v252, %v252
    %v301 = vmul.f32 %v253, %v253
    %v302 = vmul.f32 %v254, %v254
    %v303 = vmul.f32 %v255, %v255
    %v304 = vmul.f32 %v256, %v256
    %v305 = vmul.f32 %v257, %v257
    %v306 = vmul.f32 %v258, %v258
    %v307 = vmul.f32 %v259, %v259
    %v308 = vmul.f32 %v260, %v260
    %v309 = vmul.f32 %v261, %v261
    %v310 = vmul.f32 %v262, %v262
    %359 = vrot.lane.b32.xlu0 %v167, 24
    %v360 = vpop.permute.xlu0 %359
    %361 = vrot.lane.b32.xlu0 %v168, 24
    %v362 = vpop.permute.xlu0 %361
    %363 = vrot.lane.b32.xlu0 %v169, 24
    %v364 = vpop.permute.xlu0 %363
    %365 = vrot.lane.b32.xlu0 %v170, 24
    %v366 = vpop.permute.xlu0 %365
    %367 = vrot.lane.b32.xlu0 %v171, 24
    %v368 = vpop.permute.xlu0 %367
    %369 = vrot.lane.b32.xlu0 %v172, 24
    %v370 = vpop.permute.xlu0 %369
    %371 = vrot.lane.b32.xlu0 %v173, 24
    %v372 = vpop.permute.xlu0 %371
    %373 = vrot.lane.b32.xlu0 %v174, 24
    %v374 = vpop.permute.xlu0 %373
    %375 = vrot.lane.b32.xlu0 %v175, 24
    %v376 = vpop.permute.xlu0 %375
    %377 = vrot.lane.b32.xlu0 %v176, 24
    %v378 = vpop.permute.xlu0 %377
    %379 = vrot.lane.b32.xlu0 %v177, 24
    %v380 = vpop.permute.xlu0 %379
    %381 = vrot.lane.b32.xlu0 %v178, 24
    %v382 = vpop.permute.xlu0 %381
    %383 = vrot.lane.b32.xlu0 %v179, 24
    %v384 = vpop.permute.xlu0 %383
    %385 = vrot.lane.b32.xlu0 %v180, 24
    %v386 = vpop.permute.xlu0 %385
    %387 = vrot.lane.b32.xlu0 %v181, 24
    %v388 = vpop.permute.xlu0 %387
    %389 = vrot.lane.b32.xlu0 %v182, 24
    %v390 = vpop.permute.xlu0 %389
    %391 = vrot.lane.b32.xlu0 %v183, 24
    %v392 = vpop.permute.xlu0 %391
    %393 = vrot.lane.b32.xlu0 %v184, 24
    %v394 = vpop.permute.xlu0 %393
    %395 = vrot.lane.b32.xlu0 %v185, 24
    %v396 = vpop.permute.xlu0 %395
    %397 = vrot.lane.b32.xlu0 %v186, 24
    %v398 = vpop.permute.xlu0 %397
    %399 = vrot.lane.b32.xlu0 %v187, 24
    %v400 = vpop.permute.xlu0 %399
    %401 = vrot.lane.b32.xlu0 %v188, 24
    %v402 = vpop.permute.xlu0 %401
    %403 = vrot.lane.b32.xlu0 %v189, 24
    %v404 = vpop.permute.xlu0 %403
    %405 = vrot.lane.b32.xlu0 %v190, 24
    %v406 = vpop.permute.xlu0 %405
    %407 = vrot.lane.b32.xlu0 %v191, 24
    %v408 = vpop.permute.xlu0 %407
    %409 = vrot.lane.b32.xlu0 %v192, 24
    %v410 = vpop.permute.xlu0 %409
    %411 = vrot.lane.b32.xlu0 %v193, 24
    %v412 = vpop.permute.xlu0 %411
    %413 = vrot.lane.b32.xlu0 %v194, 24
    %v414 = vpop.permute.xlu0 %413
    %415 = vrot.lane.b32.xlu0 %v195, 24
    %v416 = vpop.permute.xlu0 %415
    %417 = vrot.lane.b32.xlu0 %v196, 24
    %v418 = vpop.permute.xlu0 %417
    %419 = vrot.lane.b32.xlu0 %v197, 24
    %v420 = vpop.permute.xlu0 %419
    %421 = vrot.lane.b32.xlu0 %v198, 24
    %v422 = vpop.permute.xlu0 %421
    %423 = vrot.lane.b32.xlu0 %v199, 24
    %v424 = vpop.permute.xlu0 %423
    %425 = vrot.lane.b32.xlu0 %v200, 24
    %v426 = vpop.permute.xlu0 %425
    %427 = vrot.lane.b32.xlu0 %v201, 24
    %v428 = vpop.permute.xlu0 %427
    %429 = vrot.lane.b32.xlu0 %v202, 24
    %v430 = vpop.permute.xlu0 %429
    %431 = vrot.lane.b32.xlu0 %v203, 24
    %v432 = vpop.permute.xlu0 %431
    %433 = vrot.lane.b32.xlu0 %v204, 24
    %v434 = vpop.permute.xlu0 %433
    %435 = vrot.lane.b32.xlu0 %v205, 24
    %v436 = vpop.permute.xlu0 %435
    %437 = vrot.lane.b32.xlu0 %v206, 24
    %v438 = vpop.permute.xlu0 %437
    %439 = vrot.lane.b32.xlu0 %v207, 24
    %v440 = vpop.permute.xlu0 %439
    %441 = vrot.lane.b32.xlu0 %v208, 24
    %v442 = vpop.permute.xlu0 %441
    %443 = vrot.lane.b32.xlu0 %v209, 24
    %v444 = vpop.permute.xlu0 %443
    %445 = vrot.lane.b32.xlu0 %v210, 24
    %v446 = vpop.permute.xlu0 %445
    %447 = vrot.lane.b32.xlu0 %v211, 24
    %v448 = vpop.permute.xlu0 %447
    %449 = vrot.lane.b32.xlu0 %v212, 24
    %v450 = vpop.permute.xlu0 %449
    %451 = vrot.lane.b32.xlu0 %v213, 24
    %v452 = vpop.permute.xlu0 %451
    %453 = vrot.lane.b32.xlu0 %v214, 24
    %v454 = vpop.permute.xlu0 %453
    %551 = vrot.lane.b32.xlu0 %v263, 48
    %v552 = vpop.permute.xlu0 %551
    %553 = vrot.lane.b32.xlu0 %v264, 48
    %v554 = vpop.permute.xlu0 %553
    %555 = vrot.lane.b32.xlu0 %v265, 48
    %v556 = vpop.permute.xlu0 %555
    %557 = vrot.lane.b32.xlu0 %v266, 48
    %v558 = vpop.permute.xlu0 %557
    %559 = vrot.lane.b32.xlu0 %v267, 48
    %v560 = vpop.permute.xlu0 %559
    %561 = vrot.lane.b32.xlu0 %v268, 48
    %v562 = vpop.permute.xlu0 %561
    %563 = vrot.lane.b32.xlu0 %v269, 48
    %v564 = vpop.permute.xlu0 %563
    %565 = vrot.lane.b32.xlu0 %v270, 48
    %v566 = vpop.permute.xlu0 %565
    %567 = vrot.lane.b32.xlu0 %v271, 48
    %v568 = vpop.permute.xlu0 %567
    %569 = vrot.lane.b32.xlu0 %v272, 48
    %v570 = vpop.permute.xlu0 %569
    %571 = vrot.lane.b32.xlu0 %v273, 48
    %v572 = vpop.permute.xlu0 %571
    %573 = vrot.lane.b32.xlu0 %v274, 48
    %v574 = vpop.permute.xlu0 %573
    %575 = vrot.lane.b32.xlu0 %v275, 48
    %v576 = vpop.permute.xlu0 %575
    %577 = vrot.lane.b32.xlu0 %v276, 48
    %v578 = vpop.permute.xlu0 %577
    %579 = vrot.lane.b32.xlu0 %v277, 48
    %v580 = vpop.permute.xlu0 %579
    %581 = vrot.lane.b32.xlu0 %v278, 48
    %v582 = vpop.permute.xlu0 %581
    %583 = vrot.lane.b32.xlu0 %v279, 48
    %v584 = vpop.permute.xlu0 %583
    %585 = vrot.lane.b32.xlu0 %v280, 48
    %v586 = vpop.permute.xlu0 %585
    %587 = vrot.lane.b32.xlu0 %v281, 48
    %v588 = vpop.permute.xlu0 %587
    %589 = vrot.lane.b32.xlu0 %v282, 48
    %v590 = vpop.permute.xlu0 %589
    %591 = vrot.lane.b32.xlu0 %v283, 48
    %v592 = vpop.permute.xlu0 %591
    %593 = vrot.lane.b32.xlu0 %v284, 48
    %v594 = vpop.permute.xlu0 %593
    %595 = vrot.lane.b32.xlu0 %v285, 48
    %v596 = vpop.permute.xlu0 %595
    %597 = vrot.lane.b32.xlu0 %v286, 48
    %v598 = vpop.permute.xlu0 %597
    %599 = vrot.lane.b32.xlu0 %v287, 48
    %v600 = vpop.permute.xlu0 %599
    %601 = vrot.lane.b32.xlu0 %v288, 48
    %v602 = vpop.permute.xlu0 %601
    %603 = vrot.lane.b32.xlu0 %v289, 48
    %v604 = vpop.permute.xlu0 %603
    %605 = vrot.lane.b32.xlu0 %v290, 48
    %v606 = vpop.permute.xlu0 %605
    %607 = vrot.lane.b32.xlu0 %v291, 48
    %v608 = vpop.permute.xlu0 %607
    %609 = vrot.lane.b32.xlu0 %v292, 48
    %v610 = vpop.permute.xlu0 %609
    %611 = vrot.lane.b32.xlu0 %v293, 48
    %v612 = vpop.permute.xlu0 %611
    %613 = vrot.lane.b32.xlu0 %v294, 48
    %v614 = vpop.permute.xlu0 %613
    %615 = vrot.lane.b32.xlu0 %v295, 48
    %v616 = vpop.permute.xlu0 %615
    %617 = vrot.lane.b32.xlu0 %v296, 48
    %v618 = vpop.permute.xlu0 %617
    %619 = vrot.lane.b32.xlu0 %v297, 48
    %v620 = vpop.permute.xlu0 %619
    %621 = vrot.lane.b32.xlu0 %v298, 48
    %v622 = vpop.permute.xlu0 %621
    %623 = vrot.lane.b32.xlu0 %v299, 48
    %v624 = vpop.permute.xlu0 %623
    %625 = vrot.lane.b32.xlu0 %v300, 48
    %v626 = vpop.permute.xlu0 %625
    %627 = vrot.lane.b32.xlu0 %v301, 48
    %v628 = vpop.permute.xlu0 %627
    %629 = vrot.lane.b32.xlu0 %v302, 48
    %v630 = vpop.permute.xlu0 %629
    %631 = vrot.lane.b32.xlu0 %v303, 48
    %v632 = vpop.permute.xlu0 %631
    %633 = vrot.lane.b32.xlu0 %v304, 48
    %v634 = vpop.permute.xlu0 %633
    %635 = vrot.lane.b32.xlu0 %v305, 48
    %v636 = vpop.permute.xlu0 %635
    %637 = vrot.lane.b32.xlu0 %v306, 48
    %v638 = vpop.permute.xlu0 %637
    %639 = vrot.lane.b32.xlu0 %v307, 48
    %v640 = vpop.permute.xlu0 %639
    %641 = vrot.lane.b32.xlu0 %v308, 48
    %v642 = vpop.permute.xlu0 %641
    %643 = vrot.lane.b32.xlu0 %v309, 48
    %v644 = vpop.permute.xlu0 %643
    %645 = vrot.lane.b32.xlu0 %v310, 48
    %v646 = vpop.permute.xlu0 %645
    %vm695 = vcmask 195584
    %v696 = vsel %vm695, %v215, %v360
    %v697 = vsel %vm695, %v216, %v362
    %v698 = vsel %vm695, %v217, %v364
    %v699 = vsel %vm695, %v218, %v366
    %v700 = vsel %vm695, %v219, %v368
    %v701 = vsel %vm695, %v220, %v370
    %v702 = vsel %vm695, %v221, %v372
    %v703 = vsel %vm695, %v222, %v374
    %v704 = vsel %vm695, %v223, %v376
    %v705 = vsel %vm695, %v224, %v378
    %v706 = vsel %vm695, %v225, %v380
    %v707 = vsel %vm695, %v226, %v382
    %v708 = vsel %vm695, %v227, %v384
    %v709 = vsel %vm695, %v228, %v386
    %v710 = vsel %vm695, %v229, %v388
    %v711 = vsel %vm695, %v230, %v390
    %v712 = vsel %vm695, %v231, %v392
    %v713 = vsel %vm695, %v232, %v394
    %v714 = vsel %vm695, %v233, %v396
    %v715 = vsel %vm695, %v234, %v398
    %v716 = vsel %vm695, %v235, %v400
    %v717 = vsel %vm695, %v236, %v402
    %v718 = vsel %vm695, %v237, %v404
    %v719 = vsel %vm695, %v238, %v406
    %v720 = vsel %vm695, %v239, %v408
    %v721 = vsel %vm695, %v240, %v410
    %v722 = vsel %vm695, %v241, %v412
    %v723 = vsel %vm695, %v242, %v414
    %v724 = vsel %vm695, %v243, %v416
    %v725 = vsel %vm695, %v244, %v418
    %v726 = vsel %vm695, %v245, %v420
    %v727 = vsel %vm695, %v246, %v422
    %v728 = vsel %vm695, %v247, %v424
    %v729 = vsel %vm695, %v248, %v426
    %v730 = vsel %vm695, %v249, %v428
    %v731 = vsel %vm695, %v250, %v430
    %v732 = vsel %vm695, %v251, %v432
    %v733 = vsel %vm695, %v252, %v434
    %v734 = vsel %vm695, %v253, %v436
    %v735 = vsel %vm695, %v254, %v438
    %v736 = vsel %vm695, %v255, %v440
    %v737 = vsel %vm695, %v256, %v442
    %v738 = vsel %vm695, %v257, %v444
    %v739 = vsel %vm695, %v258, %v446
    %v740 = vsel %vm695, %v259, %v448
    %v741 = vsel %vm695, %v260, %v450
    %v742 = vsel %vm695, %v261, %v452
    %v743 = vsel %vm695, %v262, %v454
    %vm744 = vcmask 392192
    %v745 = vsel %vm744, %v696, %v552
    %v746 = vsel %vm744, %v697, %v554
    %v747 = vsel %vm744, %v698, %v556
    %v748 = vsel %vm744, %v699, %v558
    %v749 = vsel %vm744, %v700, %v560
    %v750 = vsel %vm744, %v701, %v562
    %v751 = vsel %vm744, %v702, %v564
    %v752 = vsel %vm744, %v703, %v566
    %v753 = vsel %vm744, %v704, %v568
    %v754 = vsel %vm744, %v705, %v570
    %v755 = vsel %vm744, %v706, %v572
    %v756 = vsel %vm744, %v707, %v574
    %v757 = vsel %vm744, %v708, %v576
    %v758 = vsel %vm744, %v709, %v578
    %v759 = vsel %vm744, %v710, %v580
    %v760 = vsel %vm744, %v711, %v582
    %v761 = vsel %vm744, %v712, %v584
    %v762 = vsel %vm744, %v713, %v586
    %v763 = vsel %vm744, %v714, %v588
    %v764 = vsel %vm744, %v715, %v590
    %v765 = vsel %vm744, %v716, %v592
    %v766 = vsel %vm744, %v717, %v594
    %v767 = vsel %vm744, %v718, %v596
    %v768 = vsel %vm744, %v719, %v598
    %v769 = vsel %vm744, %v720, %v600
    %v770 = vsel %vm744, %v721, %v602
    %v771 = vsel %vm744, %v722, %v604
    %v772 = vsel %vm744, %v723, %v606
    %v773 = vsel %vm744, %v724, %v608
    %v774 = vsel %vm744, %v725, %v610
    %v775 = vsel %vm744, %v726, %v612
    %v776 = vsel %vm744, %v727, %v614
    %v777 = vsel %vm744, %v728, %v616
    %v778 = vsel %vm744, %v729, %v618
    %v779 = vsel %vm744, %v730, %v620
    %v780 = vsel %vm744, %v731, %v622
    %v781 = vsel %vm744, %v732, %v624
    %v782 = vsel %vm744, %v733, %v626
    %v783 = vsel %vm744, %v734, %v628
    %v784 = vsel %vm744, %v735, %v630
    %v785 = vsel %vm744, %v736, %v632
    %v786 = vsel %vm744, %v737, %v634
    %v787 = vsel %vm744, %v738, %v636
    %v788 = vsel %vm744, %v739, %v638
    %v789 = vsel %vm744, %v740, %v640
    %v790 = vsel %vm744, %v741, %v642
    %v791 = vsel %vm744, %v742, %v644
    %v792 = vsel %vm744, %v743, %v646
    %v793 = vld [vmem:[%s1] sm:$0xff]
    %v794 = vld [vmem:[%s1 + $0x8] sm:$0xff]
    %v795 = vld [vmem:[%s1 + $0x10] sm:$0xff]
    %v796 = vld [vmem:[%s1 + $0x18] sm:$0xff]
    %v797 = vld [vmem:[%s1 + $0x20] sm:$0xff]
    %v798 = vld [vmem:[%s1 + $0x28] sm:$0xff]
    %v799 = vld [vmem:[%s1 + $0x30] sm:$0xff]
    %v800 = vld [vmem:[%s1 + $0x38] sm:$0xff]
    %v801 = vld [vmem:[%s1 + $0x40] sm:$0xff]
    %v802 = vld [vmem:[%s1 + $0x48] sm:$0xff]
    %v803 = vld [vmem:[%s1 + $0x50] sm:$0xff]
    %v804 = vld [vmem:[%s1 + $0x58] sm:$0xff]
    %v805 = vld [vmem:[%s1 + $0x60] sm:$0xff]
    %v806 = vld [vmem:[%s1 + $0x68] sm:$0xff]
    %v807 = vld [vmem:[%s1 + $0x70] sm:$0xff]
    %v808 = vld [vmem:[%s1 + $0x78] sm:$0xff]
    %v809 = vld [vmem:[%s1 + $0x80] sm:$0xff]
    %v810 = vld [vmem:[%s1 + $0x88] sm:$0xff]
    %v811 = vld [vmem:[%s2] sm:$0x3]
    %v813 = vperm.slane %v811, 0
    %v814 = vperm.slane %v811, 1
    %vm817 = vcmask 588800
    %v819 = vsel %vm817, %v745, 0
    %v822 = vsel %vm817, %v746, 0
    %v825 = vsel %vm817, %v747, 0
    %v828 = vsel %vm817, %v748, 0
    %v831 = vsel %vm817, %v749, 0
    %v834 = vsel %vm817, %v750, 0
    %v837 = vsel %vm817, %v751, 0
    %v840 = vsel %vm817, %v752, 0
    %v843 = vsel %vm817, %v753, 0
    %v846 = vsel %vm817, %v754, 0
    %v849 = vsel %vm817, %v755, 0
    %v852 = vsel %vm817, %v756, 0
    %v855 = vsel %vm817, %v757, 0
    %v858 = vsel %vm817, %v758, 0
    %v861 = vsel %vm817, %v759, 0
    %v864 = vsel %vm817, %v760, 0
    %v867 = vsel %vm817, %v761, 0
    %v870 = vsel %vm817, %v762, 0
    %v873 = vsel %vm817, %v763, 0
    %v876 = vsel %vm817, %v764, 0
    %v879 = vsel %vm817, %v765, 0
    %v882 = vsel %vm817, %v766, 0
    %v885 = vsel %vm817, %v767, 0
    %v888 = vsel %vm817, %v768, 0
    %v891 = vsel %vm817, %v769, 0
    %v894 = vsel %vm817, %v770, 0
    %v897 = vsel %vm817, %v771, 0
    %v900 = vsel %vm817, %v772, 0
    %v903 = vsel %vm817, %v773, 0
    %v906 = vsel %vm817, %v774, 0
    %v909 = vsel %vm817, %v775, 0
    %v912 = vsel %vm817, %v776, 0
    %v915 = vsel %vm817, %v777, 0
    %v918 = vsel %vm817, %v778, 0
    %v921 = vsel %vm817, %v779, 0
    %v924 = vsel %vm817, %v780, 0
    %v927 = vsel %vm817, %v781, 0
    %v930 = vsel %vm817, %v782, 0
    %v933 = vsel %vm817, %v783, 0
    %v936 = vsel %vm817, %v784, 0
    %v939 = vsel %vm817, %v785, 0
    %v942 = vsel %vm817, %v786, 0
    %v945 = vsel %vm817, %v787, 0
    %v948 = vsel %vm817, %v788, 0
    %v951 = vsel %vm817, %v789, 0
    %v954 = vsel %vm817, %v790, 0
    %v957 = vsel %vm817, %v791, 0
    %v960 = vsel %vm817, %v792, 0
    %962 = vmatpush.msra.mxu0 0.0
    %963 = vmatpush.msra.mxu0 0.0
    %964 = vmatpush.msra.mxu0 0.0
    %965 = vmatpush.msra.mxu0 0.0
    %966 = vmatpush.msra.mxu0 0.0
    %967 = vmatpush.msra.mxu0 0.0
    %968 = vmatpush.msra.mxu0 0.0
    %969 = vmatpush.msra.mxu0 %v809
    %970 = vmatpush.msra.mxu0 %v807
    %971 = vmatpush.msra.mxu0 %v805
    %972 = vmatpush.msra.mxu0 %v803
    %973 = vmatpush.msra.mxu0 %v801
    %974 = vmatpush.msra.mxu0 %v799
    %975 = vmatpush.msra.mxu0 %v797
    %976 = vmatpush.msra.mxu0 %v795
    %977 = vmatpush.msra.mxu0 %v793
    %978 = vmatmul.f32.gmra.mxu0 %v819
    %v979 = vpop.f32.mrf.mxu0
    %v980 = vadd.f32 %v813, %v979
    %981 = vmatmul.f32.gmra.mxu0 %v822
    %v982 = vpop.f32.mrf.mxu0
    %v983 = vadd.f32 %v813, %v982
    %984 = vmatmul.f32.gmra.mxu0 %v825
    %v985 = vpop.f32.mrf.mxu0
    %v986 = vadd.f32 %v813, %v985
    %987 = vmatmul.f32.gmra.mxu0 %v828
    %v988 = vpop.f32.mrf.mxu0
    %v989 = vadd.f32 %v813, %v988
    %990 = vmatmul.f32.gmra.mxu0 %v831
    %v991 = vpop.f32.mrf.mxu0
    %v992 = vadd.f32 %v813, %v991
    %993 = vmatmul.f32.gmra.mxu0 %v834
    %v994 = vpop.f32.mrf.mxu0
    %v995 = vadd.f32 %v813, %v994
    %996 = vmatmul.f32.gmra.mxu0 %v837
    %v997 = vpop.f32.mrf.mxu0
    %v998 = vadd.f32 %v813, %v997
    %999 = vmatmul.f32.gmra.mxu0 %v840
    %v1000 = vpop.f32.mrf.mxu0
    %v1001 = vadd.f32 %v813, %v1000
    %1002 = vmatmul.f32.gmra.mxu0 %v843
    %v1003 = vpop.f32.mrf.mxu0
    %v1004 = vadd.f32 %v813, %v1003
    %1005 = vmatmul.f32.gmra.mxu0 %v846
    %v1006 = vpop.f32.mrf.mxu0
    %v1007 = vadd.f32 %v813, %v1006
    %1008 = vmatmul.f32.gmra.mxu0 %v849
    %v1009 = vpop.f32.mrf.mxu0
    %v1010 = vadd.f32 %v813, %v1009
    %1011 = vmatmul.f32.gmra.mxu0 %v852
    %v1012 = vpop.f32.mrf.mxu0
    %v1013 = vadd.f32 %v813, %v1012
    %1014 = vmatmul.f32.gmra.mxu0 %v855
    %v1015 = vpop.f32.mrf.mxu0
    %v1016 = vadd.f32 %v813, %v1015
    %1017 = vmatmul.f32.gmra.mxu0 %v858
    %v1018 = vpop.f32.mrf.mxu0
    %v1019 = vadd.f32 %v813, %v1018
    %1020 = vmatmul.f32.gmra.mxu0 %v861
    %v1021 = vpop.f32.mrf.mxu0
    %v1022 = vadd.f32 %v813, %v1021
    %1023 = vmatmul.f32.gmra.mxu0 %v864
    %v1024 = vpop.f32.mrf.mxu0
    %v1025 = vadd.f32 %v813, %v1024
    %1026 = vmatmul.f32.gmra.mxu0 %v867
    %v1027 = vpop.f32.mrf.mxu0
    %v1028 = vadd.f32 %v813, %v1027
    %1029 = vmatmul.f32.gmra.mxu0 %v870
    %v1030 = vpop.f32.mrf.mxu0
    %v1031 = vadd.f32 %v813, %v1030
    %1032 = vmatmul.f32.gmra.mxu0 %v873
    %v1033 = vpop.f32.mrf.mxu0
    %v1034 = vadd.f32 %v813, %v1033
    %1035 = vmatmul.f32.gmra.mxu0 %v876
    %v1036 = vpop.f32.mrf.mxu0
    %v1037 = vadd.f32 %v813, %v1036
    %1038 = vmatmul.f32.gmra.mxu0 %v879
    %v1039 = vpop.f32.mrf.mxu0
    %v1040 = vadd.f32 %v813, %v1039
    %1041 = vmatmul.f32.gmra.mxu0 %v882
    %v1042 = vpop.f32.mrf.mxu0
    %v1043 = vadd.f32 %v813, %v1042
    %1044 = vmatmul.f32.gmra.mxu0 %v885
    %v1045 = vpop.f32.mrf.mxu0
    %v1046 = vadd.f32 %v813, %v1045
    %1047 = vmatmul.f32.gmra.mxu0 %v888
    %v1048 = vpop.f32.mrf.mxu0
    %v1049 = vadd.f32 %v813, %v1048
    %1050 = vmatmul.f32.gmra.mxu0 %v891
    %v1051 = vpop.f32.mrf.mxu0
    %v1052 = vadd.f32 %v813, %v1051
    %1053 = vmatmul.f32.gmra.mxu0 %v894
    %v1054 = vpop.f32.mrf.mxu0
    %v1055 = vadd.f32 %v813, %v1054
    %1056 = vmatmul.f32.gmra.mxu0 %v897
    %v1057 = vpop.f32.mrf.mxu0
    %v1058 = vadd.f32 %v813, %v1057
    %1059 = vmatmul.f32.gmra.mxu0 %v900
    %v1060 = vpop.f32.mrf.mxu0
    %v1061 = vadd.f32 %v813, %v1060
    %1062 = vmatmul.f32.gmra.mxu0 %v903
    %v1063 = vpop.f32.mrf.mxu0
    %v1064 = vadd.f32 %v813, %v1063
    %1065 = vmatmul.f32.gmra.mxu0 %v906
    %v1066 = vpop.f32.mrf.mxu0
    %v1067 = vadd.f32 %v813, %v1066
    %1068 = vmatmul.f32.gmra.mxu0 %v909
    %v1069 = vpop.f32.mrf.mxu0
    %v1070 = vadd.f32 %v813, %v1069
    %1071 = vmatmul.f32.gmra.mxu0 %v912
    %v1072 = vpop.f32.mrf.mxu0
    %v1073 = vadd.f32 %v813, %v1072
    %1074 = vmatmul.f32.gmra.mxu0 %v915
    %v1075 = vpop.f32.mrf.mxu0
    %v1076 = vadd.f32 %v813, %v1075
    %1077 = vmatmul.f32.gmra.mxu0 %v918
    %v1078 = vpop.f32.mrf.mxu0
    %v1079 = vadd.f32 %v813, %v1078
    %1080 = vmatmul.f32.gmra.mxu0 %v921
    %v1081 = vpop.f32.mrf.mxu0
    %v1082 = vadd.f32 %v813, %v1081
    %1083 = vmatmul.f32.gmra.mxu0 %v924
    %v1084 = vpop.f32.mrf.mxu0
    %v1085 = vadd.f32 %v813, %v1084
    %1086 = vmatmul.f32.gmra.mxu0 %v927
    %v1087 = vpop.f32.mrf.mxu0
    %v1088 = vadd.f32 %v813, %v1087
    %1089 = vmatmul.f32.gmra.mxu0 %v930
    %v1090 = vpop.f32.mrf.mxu0
    %v1091 = vadd.f32 %v813, %v1090
    %1092 = vmatmul.f32.gmra.mxu0 %v933
    %v1093 = vpop.f32.mrf.mxu0
    %v1094 = vadd.f32 %v813, %v1093
    %1095 = vmatmul.f32.gmra.mxu0 %v936
    %v1096 = vpop.f32.mrf.mxu0
    %v1097 = vadd.f32 %v813, %v1096
    %1098 = vmatmul.f32.gmra.mxu0 %v939
    %v1099 = vpop.f32.mrf.mxu0
    %v1100 = vadd.f32 %v813, %v1099
    %1101 = vmatmul.f32.gmra.mxu0 %v942
    %v1102 = vpop.f32.mrf.mxu0
    %v1103 = vadd.f32 %v813, %v1102
    %1104 = vmatmul.f32.gmra.mxu0 %v945
    %v1105 = vpop.f32.mrf.mxu0
    %v1106 = vadd.f32 %v813, %v1105
    %1107 = vmatmul.f32.gmra.mxu0 %v948
    %v1108 = vpop.f32.mrf.mxu0
    %v1109 = vadd.f32 %v813, %v1108
    %1110 = vmatmul.f32.gmra.mxu0 %v951
    %v1111 = vpop.f32.mrf.mxu0
    %v1112 = vadd.f32 %v813, %v1111
    %1113 = vmatmul.f32.gmra.mxu0 %v954
    %v1114 = vpop.f32.mrf.mxu0
    %v1115 = vadd.f32 %v813, %v1114
    %1116 = vmatmul.f32.gmra.mxu0 %v957
    %v1117 = vpop.f32.mrf.mxu0
    %v1118 = vadd.f32 %v813, %v1117
    %1119 = vmatmul.f32.gmra.mxu0 %v960
    %v1120 = vpop.f32.mrf.mxu0
    %v1121 = vadd.f32 %v813, %v1120
    %1122 = vdwg.mxu0
    %1123 = vmatpush.msra.mxu0 0.0
    %1124 = vmatpush.msra.mxu0 0.0
    %1125 = vmatpush.msra.mxu0 0.0
    %1126 = vmatpush.msra.mxu0 0.0
    %1127 = vmatpush.msra.mxu0 0.0
    %1128 = vmatpush.msra.mxu0 0.0
    %1129 = vmatpush.msra.mxu0 0.0
    %1130 = vmatpush.msra.mxu0 %v810
    %1131 = vmatpush.msra.mxu0 %v808
    %1132 = vmatpush.msra.mxu0 %v806
    %1133 = vmatpush.msra.mxu0 %v804
    %1134 = vmatpush.msra.mxu0 %v802
    %1135 = vmatpush.msra.mxu0 %v800
    %1136 = vmatpush.msra.mxu0 %v798
    %1137 = vmatpush.msra.mxu0 %v796
    %1138 = vmatpush.msra.mxu0 %v794
    %1139 = vmatmul.f32.gmra.mxu0 %v819
    %v1140 = vpop.f32.mrf.mxu0
    %v1141 = vadd.f32 %v814, %v1140
    %1142 = vmatmul.f32.gmra.mxu0 %v822
    %v1143 = vpop.f32.mrf.mxu0
    %v1144 = vadd.f32 %v814, %v1143
    %1145 = vmatmul.f32.gmra.mxu0 %v825
    %v1146 = vpop.f32.mrf.mxu0
    %v1147 = vadd.f32 %v814, %v1146
    %1148 = vmatmul.f32.gmra.mxu0 %v828
    %v1149 = vpop.f32.mrf.mxu0
    %v1150 = vadd.f32 %v814, %v1149
    %1151 = vmatmul.f32.gmra.mxu0 %v831
    %v1152 = vpop.f32.mrf.mxu0
    %v1153 = vadd.f32 %v814, %v1152
    %1154 = vmatmul.f32.gmra.mxu0 %v834
    %v1155 = vpop.f32.mrf.mxu0
    %v1156 = vadd.f32 %v814, %v1155
    %1157 = vmatmul.f32.gmra.mxu0 %v837
    %v1158 = vpop.f32.mrf.mxu0
    %v1159 = vadd.f32 %v814, %v1158
    %1160 = vmatmul.f32.gmra.mxu0 %v840
    %v1161 = vpop.f32.mrf.mxu0
    %v1162 = vadd.f32 %v814, %v1161
    %1163 = vmatmul.f32.gmra.mxu0 %v843
    %v1164 = vpop.f32.mrf.mxu0
    %v1165 = vadd.f32 %v814, %v1164
    %1166 = vmatmul.f32.gmra.mxu0 %v846
    %v1167 = vpop.f32.mrf.mxu0
    %v1168 = vadd.f32 %v814, %v1167
    %1169 = vmatmul.f32.gmra.mxu0 %v849
    %v1170 = vpop.f32.mrf.mxu0
    %v1171 = vadd.f32 %v814, %v1170
    %1172 = vmatmul.f32.gmra.mxu0 %v852
    %v1173 = vpop.f32.mrf.mxu0
    %v1174 = vadd.f32 %v814, %v1173
    %1175 = vmatmul.f32.gmra.mxu0 %v855
    %v1176 = vpop.f32.mrf.mxu0
    %v1177 = vadd.f32 %v814, %v1176
    %1178 = vmatmul.f32.gmra.mxu0 %v858
    %v1179 = vpop.f32.mrf.mxu0
    %v1180 = vadd.f32 %v814, %v1179
    %1181 = vmatmul.f32.gmra.mxu0 %v861
    %v1182 = vpop.f32.mrf.mxu0
    %v1183 = vadd.f32 %v814, %v1182
    %1184 = vmatmul.f32.gmra.mxu0 %v864
    %v1185 = vpop.f32.mrf.mxu0
    %v1186 = vadd.f32 %v814, %v1185
    %1187 = vmatmul.f32.gmra.mxu0 %v867
    %v1188 = vpop.f32.mrf.mxu0
    %v1189 = vadd.f32 %v814, %v1188
    %1190 = vmatmul.f32.gmra.mxu0 %v870
    %v1191 = vpop.f32.mrf.mxu0
    %v1192 = vadd.f32 %v814, %v1191
    %1193 = vmatmul.f32.gmra.mxu0 %v873
    %v1194 = vpop.f32.mrf.mxu0
    %v1195 = vadd.f32 %v814, %v1194
    %1196 = vmatmul.f32.gmra.mxu0 %v876
    %v1197 = vpop.f32.mrf.mxu0
    %v1198 = vadd.f32 %v814, %v1197
    %1199 = vmatmul.f32.gmra.mxu0 %v879
    %v1200 = vpop.f32.mrf.mxu0
    %v1201 = vadd.f32 %v814, %v1200
    %1202 = vmatmul.f32.gmra.mxu0 %v882
    %v1203 = vpop.f32.mrf.mxu0
    %v1204 = vadd.f32 %v814, %v1203
    %1205 = vmatmul.f32.gmra.mxu0 %v885
    %v1206 = vpop.f32.mrf.mxu0
    %v1207 = vadd.f32 %v814, %v1206
    %1208 = vmatmul.f32.gmra.mxu0 %v888
    %v1209 = vpop.f32.mrf.mxu0
    %v1210 = vadd.f32 %v814, %v1209
    %1211 = vmatmul.f32.gmra.mxu0 %v891
    %v1212 = vpop.f32.mrf.mxu0
    %v1213 = vadd.f32 %v814, %v1212
    %1214 = vmatmul.f32.gmra.mxu0 %v894
    %v1215 = vpop.f32.mrf.mxu0
    %v1216 = vadd.f32 %v814, %v1215
    %1217 = vmatmul.f32.gmra.mxu0 %v897
    %v1218 = vpop.f32.mrf.mxu0
    %v1219 = vadd.f32 %v814, %v1218
    %1220 = vmatmul.f32.gmra.mxu0 %v900
    %v1221 = vpop.f32.mrf.mxu0
    %v1222 = vadd.f32 %v814, %v1221
    %1223 = vmatmul.f32.gmra.mxu0 %v903
    %v1224 = vpop.f32.mrf.mxu0
    %v1225 = vadd.f32 %v814, %v1224
    %1226 = vmatmul.f32.gmra.mxu0 %v906
    %v1227 = vpop.f32.mrf.mxu0
    %v1228 = vadd.f32 %v814, %v1227
    %1229 = vmatmul.f32.gmra.mxu0 %v909
    %v1230 = vpop.f32.mrf.mxu0
    %v1231 = vadd.f32 %v814, %v1230
    %1232 = vmatmul.f32.gmra.mxu0 %v912
    %v1233 = vpop.f32.mrf.mxu0
    %v1234 = vadd.f32 %v814, %v1233
    %1235 = vmatmul.f32.gmra.mxu0 %v915
    %v1236 = vpop.f32.mrf.mxu0
    %v1237 = vadd.f32 %v814, %v1236
    %1238 = vmatmul.f32.gmra.mxu0 %v918
    %v1239 = vpop.f32.mrf.mxu0
    %v1240 = vadd.f32 %v814, %v1239
    %1241 = vmatmul.f32.gmra.mxu0 %v921
    %v1242 = vpop.f32.mrf.mxu0
    %v1243 = vadd.f32 %v814, %v1242
    %1244 = vmatmul.f32.gmra.mxu0 %v924
    %v1245 = vpop.f32.mrf.mxu0
    %v1246 = vadd.f32 %v814, %v1245
    %1247 = vmatmul.f32.gmra.mxu0 %v927
    %v1248 = vpop.f32.mrf.mxu0
    %v1249 = vadd.f32 %v814, %v1248
    %1250 = vmatmul.f32.gmra.mxu0 %v930
    %v1251 = vpop.f32.mrf.mxu0
    %v1252 = vadd.f32 %v814, %v1251
    %1253 = vmatmul.f32.gmra.mxu0 %v933
    %v1254 = vpop.f32.mrf.mxu0
    %v1255 = vadd.f32 %v814, %v1254
    %1256 = vmatmul.f32.gmra.mxu0 %v936
    %v1257 = vpop.f32.mrf.mxu0
    %v1258 = vadd.f32 %v814, %v1257
    %1259 = vmatmul.f32.gmra.mxu0 %v939
    %v1260 = vpop.f32.mrf.mxu0
    %v1261 = vadd.f32 %v814, %v1260
    %1262 = vmatmul.f32.gmra.mxu0 %v942
    %v1263 = vpop.f32.mrf.mxu0
    %v1264 = vadd.f32 %v814, %v1263
    %1265 = vmatmul.f32.gmra.mxu0 %v945
    %v1266 = vpop.f32.mrf.mxu0
    %v1267 = vadd.f32 %v814, %v1266
    %1268 = vmatmul.f32.gmra.mxu0 %v948
    %v1269 = vpop.f32.mrf.mxu0
    %v1270 = vadd.f32 %v814, %v1269
    %1271 = vmatmul.f32.gmra.mxu0 %v951
    %v1272 = vpop.f32.mrf.mxu0
    %v1273 = vadd.f32 %v814, %v1272
    %1274 = vmatmul.f32.gmra.mxu0 %v954
    %v1275 = vpop.f32.mrf.mxu0
    %v1276 = vadd.f32 %v814, %v1275
    %1277 = vmatmul.f32.gmra.mxu0 %v957
    %v1278 = vpop.f32.mrf.mxu0
    %v1279 = vadd.f32 %v814, %v1278
    %1280 = vmatmul.f32.gmra.mxu0 %v960
    %v1281 = vpop.f32.mrf.mxu0
    %v1282 = vadd.f32 %v814, %v1281
    %1283 = vdwg.mxu0
    %1284 = vst [vmem:[#allocation2] sm:$0xff] %v980
    %1285 = vst [vmem:[#allocation2 + $0x8] sm:$0xff] %v1141
    %1286 = vst [vmem:[#allocation2 + $0x10] sm:$0xff] %v983
    %1287 = vst [vmem:[#allocation2 + $0x18] sm:$0xff] %v1144
    %1288 = vst [vmem:[#allocation2 + $0x20] sm:$0xff] %v986
    %1289 = vst [vmem:[#allocation2 + $0x28] sm:$0xff] %v1147
    %1290 = vst [vmem:[#allocation2 + $0x30] sm:$0xff] %v989
    %1291 = vst [vmem:[#allocation2 + $0x38] sm:$0xff] %v1150
    %1292 = vst [vmem:[#allocation2 + $0x40] sm:$0xff] %v992
    %1293 = vst [vmem:[#allocation2 + $0x48] sm:$0xff] %v1153
    %1294 = vst [vmem:[#allocation2 + $0x50] sm:$0xff] %v995
    %1295 = vst [vmem:[#allocation2 + $0x58] sm:$0xff] %v1156
    %1296 = vst [vmem:[#allocation2 + $0x60] sm:$0xff] %v998
    %1297 = vst [vmem:[#allocation2 + $0x68] sm:$0xff] %v1159
    %1298 = vst [vmem:[#allocation2 + $0x70] sm:$0xff] %v1001
    %1299 = vst [vmem:[#allocation2 + $0x78] sm:$0xff] %v1162
    %1300 = vst [vmem:[#allocation2 + $0x80] sm:$0xff] %v1004
    %1301 = vst [vmem:[#allocation2 + $0x88] sm:$0xff] %v1165
    %1302 = vst [vmem:[#allocation2 + $0x90] sm:$0xff] %v1007
    %1303 = vst [vmem:[#allocation2 + $0x98] sm:$0xff] %v1168
    %1304 = vst [vmem:[#allocation2 + $0xa0] sm:$0xff] %v1010
    %1305 = vst [vmem:[#allocation2 + $0xa8] sm:$0xff] %v1171
    %1306 = vst [vmem:[#allocation2 + $0xb0] sm:$0xff] %v1013
    %1307 = vst [vmem:[#allocation2 + $0xb8] sm:$0xff] %v1174
    %1308 = vst [vmem:[#allocation2 + $0xc0] sm:$0xff] %v1016
    %1309 = vst [vmem:[#allocation2 + $0xc8] sm:$0xff] %v1177
    %1310 = vst [vmem:[#allocation2 + $0xd0] sm:$0xff] %v1019
    %1311 = vst [vmem:[#allocation2 + $0xd8] sm:$0xff] %v1180
    %1312 = vst [vmem:[#allocation2 + $0xe0] sm:$0xff] %v1022
    %1313 = vst [vmem:[#allocation2 + $0xe8] sm:$0xff] %v1183
    %1314 = vst [vmem:[#allocation2 + $0xf0] sm:$0xff] %v1025
    %1315 = vst [vmem:[#allocation2 + $0xf8] sm:$0xff] %v1186
    %1316 = vst [vmem:[#allocation2 + $0x100] sm:$0xff] %v1028
    %1317 = vst [vmem:[#allocation2 + $0x108] sm:$0xff] %v1189
    %1318 = vst [vmem:[#allocation2 + $0x110] sm:$0xff] %v1031
    %1319 = vst [vmem:[#allocation2 + $0x118] sm:$0xff] %v1192
    %1320 = vst [vmem:[#allocation2 + $0x120] sm:$0xff] %v1034
    %1321 = vst [vmem:[#allocation2 + $0x128] sm:$0xff] %v1195
    %1322 = vst [vmem:[#allocation2 + $0x130] sm:$0xff] %v1037
    %1323 = vst [vmem:[#allocation2 + $0x138] sm:$0xff] %v1198
    %1324 = vst [vmem:[#allocation2 + $0x140] sm:$0xff] %v1040
    %1325 = vst [vmem:[#allocation2 + $0x148] sm:$0xff] %v1201
    %1326 = vst [vmem:[#allocation2 + $0x150] sm:$0xff] %v1043
    %1327 = vst [vmem:[#allocation2 + $0x158] sm:$0xff] %v1204
    %1328 = vst [vmem:[#allocation2 + $0x160] sm:$0xff] %v1046
    %1329 = vst [vmem:[#allocation2 + $0x168] sm:$0xff] %v1207
    %1330 = vst [vmem:[#allocation2 + $0x170] sm:$0xff] %v1049
    %1331 = vst [vmem:[#allocation2 + $0x178] sm:$0xff] %v1210
    %1332 = vst [vmem:[#allocation2 + $0x180] sm:$0xff] %v1052
    %1333 = vst [vmem:[#allocation2 + $0x188] sm:$0xff] %v1213
    %1334 = vst [vmem:[#allocation2 + $0x190] sm:$0xff] %v1055
    %1335 = vst [vmem:[#allocation2 + $0x198] sm:$0xff] %v1216
    %1336 = vst [vmem:[#allocation2 + $0x1a0] sm:$0xff] %v1058
    %1337 = vst [vmem:[#allocation2 + $0x1a8] sm:$0xff] %v1219
    %1338 = vst [vmem:[#allocation2 + $0x1b0] sm:$0xff] %v1061
    %1339 = vst [vmem:[#allocation2 + $0x1b8] sm:$0xff] %v1222
    %1340 = vst [vmem:[#allocation2 + $0x1c0] sm:$0xff] %v1064
    %1341 = vst [vmem:[#allocation2 + $0x1c8] sm:$0xff] %v1225
    %1342 = vst [vmem:[#allocation2 + $0x1d0] sm:$0xff] %v1067
    %1343 = vst [vmem:[#allocation2 + $0x1d8] sm:$0xff] %v1228
    %1344 = vst [vmem:[#allocation2 + $0x1e0] sm:$0xff] %v1070
    %1345 = vst [vmem:[#allocation2 + $0x1e8] sm:$0xff] %v1231
    %1346 = vst [vmem:[#allocation2 + $0x1f0] sm:$0xff] %v1073
    %1347 = vst [vmem:[#allocation2 + $0x1f8] sm:$0xff] %v1234
    %1348 = vst [vmem:[#allocation2 + $0x200] sm:$0xff] %v1076
    %1349 = vst [vmem:[#allocation2 + $0x208] sm:$0xff] %v1237
    %1350 = vst [vmem:[#allocation2 + $0x210] sm:$0xff] %v1079
    %1351 = vst [vmem:[#allocation2 + $0x218] sm:$0xff] %v1240
    %1352 = vst [vmem:[#allocation2 + $0x220] sm:$0xff] %v1082
    %1353 = vst [vmem:[#allocation2 + $0x228] sm:$0xff] %v1243
    %1354 = vst [vmem:[#allocation2 + $0x230] sm:$0xff] %v1085
    %1355 = vst [vmem:[#allocation2 + $0x238] sm:$0xff] %v1246
    %1356 = vst [vmem:[#allocation2 + $0x240] sm:$0xff] %v1088
    %1357 = vst [vmem:[#allocation2 + $0x248] sm:$0xff] %v1249
    %1358 = vst [vmem:[#allocation2 + $0x250] sm:$0xff] %v1091
    %1359 = vst [vmem:[#allocation2 + $0x258] sm:$0xff] %v1252
    %1360 = vst [vmem:[#allocation2 + $0x260] sm:$0xff] %v1094
    %1361 = vst [vmem:[#allocation2 + $0x268] sm:$0xff] %v1255
    %1362 = vst [vmem:[#allocation2 + $0x270] sm:$0xff] %v1097
    %1363 = vst [vmem:[#allocation2 + $0x278] sm:$0xff] %v1258
    %1364 = vst [vmem:[#allocation2 + $0x280] sm:$0xff] %v1100
    %1365 = vst [vmem:[#allocation2 + $0x288] sm:$0xff] %v1261
    %1366 = vst [vmem:[#allocation2 + $0x290] sm:$0xff] %v1103
    %1367 = vst [vmem:[#allocation2 + $0x298] sm:$0xff] %v1264
    %1368 = vst [vmem:[#allocation2 + $0x2a0] sm:$0xff] %v1106
    %1369 = vst [vmem:[#allocation2 + $0x2a8] sm:$0xff] %v1267
    %1370 = vst [vmem:[#allocation2 + $0x2b0] sm:$0xff] %v1109
    %1371 = vst [vmem:[#allocation2 + $0x2b8] sm:$0xff] %v1270
    %1372 = vst [vmem:[#allocation2 + $0x2c0] sm:$0xff] %v1112
    %1373 = vst [vmem:[#allocation2 + $0x2c8] sm:$0xff] %v1273
    %1374 = vst [vmem:[#allocation2 + $0x2d0] sm:$0xff] %v1115
    %1375 = vst [vmem:[#allocation2 + $0x2d8] sm:$0xff] %v1276
    %1376 = vst [vmem:[#allocation2 + $0x2e0] sm:$0xff] %v1118
    %1377 = vst [vmem:[#allocation2 + $0x2e8] sm:$0xff] %v1279
    %1378 = vst [vmem:[#allocation2 + $0x2f0] sm:$0xff] %v1121
    %1379 = vst [vmem:[#allocation2 + $0x2f8] sm:$0xff] %v1282
    %v1380 = vld [vmem:[%s3] sm:$0xff]
    %v1381 = vld [vmem:[%s3 + $0x8] sm:$0xff]
    %v1382 = vld [vmem:[%s3 + $0x10] sm:$0xff]
    %v1383 = vld [vmem:[%s3 + $0x18] sm:$0xff]
    %v1384 = vld [vmem:[%s3 + $0x20] sm:$0xff]
    %v1385 = vld [vmem:[%s3 + $0x28] sm:$0xff]
    %v1386 = vld [vmem:[%s3 + $0x30] sm:$0xff]
    %v1387 = vld [vmem:[%s3 + $0x38] sm:$0xff]
    %v1388 = vld [vmem:[%s3 + $0x40] sm:$0xff]
    %v1389 = vld [vmem:[%s4] sm:$0x1]
    %v1391 = vperm.slane %v1389, 0
    %1393 = vmatpush.msra.mxu0 0.0
    %1394 = vmatpush.msra.mxu0 0.0
    %1395 = vmatpush.msra.mxu0 0.0
    %1396 = vmatpush.msra.mxu0 0.0
    %1397 = vmatpush.msra.mxu0 0.0
    %1398 = vmatpush.msra.mxu0 0.0
    %1399 = vmatpush.msra.mxu0 0.0
    %1400 = vmatpush.msra.mxu0 %v1388
    %1401 = vmatpush.msra.mxu0 %v1387
    %1402 = vmatpush.msra.mxu0 %v1386
    %1403 = vmatpush.msra.mxu0 %v1385
    %1404 = vmatpush.msra.mxu0 %v1384
    %1405 = vmatpush.msra.mxu0 %v1383
    %1406 = vmatpush.msra.mxu0 %v1382
    %1407 = vmatpush.msra.mxu0 %v1381
    %1408 = vmatpush.msra.mxu0 %v1380
    %1409 = vmatmul.f32.gmra.mxu0 %v819
    %v1410 = vpop.f32.mrf.mxu0
    %v1411 = vadd.f32 %v1391, %v1410
    %1412 = vmatmul.f32.gmra.mxu0 %v822
    %v1413 = vpop.f32.mrf.mxu0
    %v1414 = vadd.f32 %v1391, %v1413
    %1415 = vmatmul.f32.gmra.mxu0 %v825
    %v1416 = vpop.f32.mrf.mxu0
    %v1417 = vadd.f32 %v1391, %v1416
    %1418 = vmatmul.f32.gmra.mxu0 %v828
    %v1419 = vpop.f32.mrf.mxu0
    %v1420 = vadd.f32 %v1391, %v1419
    %1421 = vmatmul.f32.gmra.mxu0 %v831
    %v1422 = vpop.f32.mrf.mxu0
    %v1423 = vadd.f32 %v1391, %v1422
    %1424 = vmatmul.f32.gmra.mxu0 %v834
    %v1425 = vpop.f32.mrf.mxu0
    %v1426 = vadd.f32 %v1391, %v1425
    %1427 = vmatmul.f32.gmra.mxu0 %v837
    %v1428 = vpop.f32.mrf.mxu0
    %v1429 = vadd.f32 %v1391, %v1428
    %1430 = vmatmul.f32.gmra.mxu0 %v840
    %v1431 = vpop.f32.mrf.mxu0
    %v1432 = vadd.f32 %v1391, %v1431
    %1433 = vmatmul.f32.gmra.mxu0 %v843
    %v1434 = vpop.f32.mrf.mxu0
    %v1435 = vadd.f32 %v1391, %v1434
    %1436 = vmatmul.f32.gmra.mxu0 %v846
    %v1437 = vpop.f32.mrf.mxu0
    %v1438 = vadd.f32 %v1391, %v1437
    %1439 = vmatmul.f32.gmra.mxu0 %v849
    %v1440 = vpop.f32.mrf.mxu0
    %v1441 = vadd.f32 %v1391, %v1440
    %1442 = vmatmul.f32.gmra.mxu0 %v852
    %v1443 = vpop.f32.mrf.mxu0
    %v1444 = vadd.f32 %v1391, %v1443
    %1445 = vmatmul.f32.gmra.mxu0 %v855
    %v1446 = vpop.f32.mrf.mxu0
    %v1447 = vadd.f32 %v1391, %v1446
    %1448 = vmatmul.f32.gmra.mxu0 %v858
    %v1449 = vpop.f32.mrf.mxu0
    %v1450 = vadd.f32 %v1391, %v1449
    %1451 = vmatmul.f32.gmra.mxu0 %v861
    %v1452 = vpop.f32.mrf.mxu0
    %v1453 = vadd.f32 %v1391, %v1452
    %1454 = vmatmul.f32.gmra.mxu0 %v864
    %v1455 = vpop.f32.mrf.mxu0
    %v1456 = vadd.f32 %v1391, %v1455
    %1457 = vmatmul.f32.gmra.mxu0 %v867
    %v1458 = vpop.f32.mrf.mxu0
    %v1459 = vadd.f32 %v1391, %v1458
    %1460 = vmatmul.f32.gmra.mxu0 %v870
    %v1461 = vpop.f32.mrf.mxu0
    %v1462 = vadd.f32 %v1391, %v1461
    %1463 = vmatmul.f32.gmra.mxu0 %v873
    %v1464 = vpop.f32.mrf.mxu0
    %v1465 = vadd.f32 %v1391, %v1464
    %1466 = vmatmul.f32.gmra.mxu0 %v876
    %v1467 = vpop.f32.mrf.mxu0
    %v1468 = vadd.f32 %v1391, %v1467
    %1469 = vmatmul.f32.gmra.mxu0 %v879
    %v1470 = vpop.f32.mrf.mxu0
    %v1471 = vadd.f32 %v1391, %v1470
    %1472 = vmatmul.f32.gmra.mxu0 %v882
    %v1473 = vpop.f32.mrf.mxu0
    %v1474 = vadd.f32 %v1391, %v1473
    %1475 = vmatmul.f32.gmra.mxu0 %v885
    %v1476 = vpop.f32.mrf.mxu0
    %v1477 = vadd.f32 %v1391, %v1476
    %1478 = vmatmul.f32.gmra.mxu0 %v888
    %v1479 = vpop.f32.mrf.mxu0
    %v1480 = vadd.f32 %v1391, %v1479
    %1481 = vmatmul.f32.gmra.mxu0 %v891
    %v1482 = vpop.f32.mrf.mxu0
    %v1483 = vadd.f32 %v1391, %v1482
    %1484 = vmatmul.f32.gmra.mxu0 %v894
    %v1485 = vpop.f32.mrf.mxu0
    %v1486 = vadd.f32 %v1391, %v1485
    %1487 = vmatmul.f32.gmra.mxu0 %v897
    %v1488 = vpop.f32.mrf.mxu0
    %v1489 = vadd.f32 %v1391, %v1488
    %1490 = vmatmul.f32.gmra.mxu0 %v900
    %v1491 = vpop.f32.mrf.mxu0
    %v1492 = vadd.f32 %v1391, %v1491
    %1493 = vmatmul.f32.gmra.mxu0 %v903
    %v1494 = vpop.f32.mrf.mxu0
    %v1495 = vadd.f32 %v1391, %v1494
    %1496 = vmatmul.f32.gmra.mxu0 %v906
    %v1497 = vpop.f32.mrf.mxu0
    %v1498 = vadd.f32 %v1391, %v1497
    %1499 = vmatmul.f32.gmra.mxu0 %v909
    %v1500 = vpop.f32.mrf.mxu0
    %v1501 = vadd.f32 %v1391, %v1500
    %1502 = vmatmul.f32.gmra.mxu0 %v912
    %v1503 = vpop.f32.mrf.mxu0
    %v1504 = vadd.f32 %v1391, %v1503
    %1505 = vmatmul.f32.gmra.mxu0 %v915
    %v1506 = vpop.f32.mrf.mxu0
    %v1507 = vadd.f32 %v1391, %v1506
    %1508 = vmatmul.f32.gmra.mxu0 %v918
    %v1509 = vpop.f32.mrf.mxu0
    %v1510 = vadd.f32 %v1391, %v1509
    %1511 = vmatmul.f32.gmra.mxu0 %v921
    %v1512 = vpop.f32.mrf.mxu0
    %v1513 = vadd.f32 %v1391, %v1512
    %1514 = vmatmul.f32.gmra.mxu0 %v924
    %v1515 = vpop.f32.mrf.mxu0
    %v1516 = vadd.f32 %v1391, %v1515
    %1517 = vmatmul.f32.gmra.mxu0 %v927
    %v1518 = vpop.f32.mrf.mxu0
    %v1519 = vadd.f32 %v1391, %v1518
    %1520 = vmatmul.f32.gmra.mxu0 %v930
    %v1521 = vpop.f32.mrf.mxu0
    %v1522 = vadd.f32 %v1391, %v1521
    %1523 = vmatmul.f32.gmra.mxu0 %v933
    %v1524 = vpop.f32.mrf.mxu0
    %v1525 = vadd.f32 %v1391, %v1524
    %1526 = vmatmul.f32.gmra.mxu0 %v936
    %v1527 = vpop.f32.mrf.mxu0
    %v1528 = vadd.f32 %v1391, %v1527
    %1529 = vmatmul.f32.gmra.mxu0 %v939
    %v1530 = vpop.f32.mrf.mxu0
    %v1531 = vadd.f32 %v1391, %v1530
    %1532 = vmatmul.f32.gmra.mxu0 %v942
    %v1533 = vpop.f32.mrf.mxu0
    %v1534 = vadd.f32 %v1391, %v1533
    %1535 = vmatmul.f32.gmra.mxu0 %v945
    %v1536 = vpop.f32.mrf.mxu0
    %v1537 = vadd.f32 %v1391, %v1536
    %1538 = vmatmul.f32.gmra.mxu0 %v948
    %v1539 = vpop.f32.mrf.mxu0
    %v1540 = vadd.f32 %v1391, %v1539
    %1541 = vmatmul.f32.gmra.mxu0 %v951
    %v1542 = vpop.f32.mrf.mxu0
    %v1543 = vadd.f32 %v1391, %v1542
    %1544 = vmatmul.f32.gmra.mxu0 %v954
    %v1545 = vpop.f32.mrf.mxu0
    %v1546 = vadd.f32 %v1391, %v1545
    %1547 = vmatmul.f32.gmra.mxu0 %v957
    %v1548 = vpop.f32.mrf.mxu0
    %v1549 = vadd.f32 %v1391, %v1548
    %1550 = vmatmul.f32.gmra.mxu0 %v960
    %v1551 = vpop.f32.mrf.mxu0
    %v1552 = vadd.f32 %v1391, %v1551
    %1553 = vdwg.mxu0
    %vm1554 = vcmask 31744
    %v1555 = vsel %vm1554, %v1411, -inf
    %1556 = vmax.xlane.f32.xlu0 %v1555
    %v1557 = vpop.xlane.xlu0 %1556
    %v1558 = vsel %vm1554, %v1414, -inf
    %1559 = vmax.xlane.f32.xlu0 %v1558
    %v1560 = vpop.xlane.xlu0 %1559
    %v1561 = vsel %vm1554, %v1417, -inf
    %1562 = vmax.xlane.f32.xlu0 %v1561
    %v1563 = vpop.xlane.xlu0 %1562
    %v1564 = vsel %vm1554, %v1420, -inf
    %1565 = vmax.xlane.f32.xlu0 %v1564
    %v1566 = vpop.xlane.xlu0 %1565
    %v1567 = vsel %vm1554, %v1423, -inf
    %1568 = vmax.xlane.f32.xlu0 %v1567
    %v1569 = vpop.xlane.xlu0 %1568
    %v1570 = vsel %vm1554, %v1426, -inf
    %1571 = vmax.xlane.f32.xlu0 %v1570
    %v1572 = vpop.xlane.xlu0 %1571
    %v1573 = vsel %vm1554, %v1429, -inf
    %1574 = vmax.xlane.f32.xlu0 %v1573
    %v1575 = vpop.xlane.xlu0 %1574
    %v1576 = vsel %vm1554, %v1432, -inf
    %1577 = vmax.xlane.f32.xlu0 %v1576
    %v1578 = vpop.xlane.xlu0 %1577
    %v1579 = vsel %vm1554, %v1435, -inf
    %1580 = vmax.xlane.f32.xlu0 %v1579
    %v1581 = vpop.xlane.xlu0 %1580
    %v1582 = vsel %vm1554, %v1438, -inf
    %1583 = vmax.xlane.f32.xlu0 %v1582
    %v1584 = vpop.xlane.xlu0 %1583
    %v1585 = vsel %vm1554, %v1441, -inf
    %1586 = vmax.xlane.f32.xlu0 %v1585
    %v1587 = vpop.xlane.xlu0 %1586
    %v1588 = vsel %vm1554, %v1444, -inf
    %1589 = vmax.xlane.f32.xlu0 %v1588
    %v1590 = vpop.xlane.xlu0 %1589
    %v1591 = vsel %vm1554, %v1447, -inf
    %1592 = vmax.xlane.f32.xlu0 %v1591
    %v1593 = vpop.xlane.xlu0 %1592
    %v1594 = vsel %vm1554, %v1450, -inf
    %1595 = vmax.xlane.f32.xlu0 %v1594
    %v1596 = vpop.xlane.xlu0 %1595
    %v1597 = vsel %vm1554, %v1453, -inf
    %1598 = vmax.xlane.f32.xlu0 %v1597
    %v1599 = vpop.xlane.xlu0 %1598
    %v1600 = vsel %vm1554, %v1456, -inf
    %1601 = vmax.xlane.f32.xlu0 %v1600
    %v1602 = vpop.xlane.xlu0 %1601
    %v1603 = vsel %vm1554, %v1459, -inf
    %1604 = vmax.xlane.f32.xlu0 %v1603
    %v1605 = vpop.xlane.xlu0 %1604
    %v1606 = vsel %vm1554, %v1462, -inf
    %1607 = vmax.xlane.f32.xlu0 %v1606
    %v1608 = vpop.xlane.xlu0 %1607
    %v1609 = vsel %vm1554, %v1465, -inf
    %1610 = vmax.xlane.f32.xlu0 %v1609
    %v1611 = vpop.xlane.xlu0 %1610
    %v1612 = vsel %vm1554, %v1468, -inf
    %1613 = vmax.xlane.f32.xlu0 %v1612
    %v1614 = vpop.xlane.xlu0 %1613
    %v1615 = vsel %vm1554, %v1471, -inf
    %1616 = vmax.xlane.f32.xlu0 %v1615
    %v1617 = vpop.xlane.xlu0 %1616
    %v1618 = vsel %vm1554, %v1474, -inf
    %1619 = vmax.xlane.f32.xlu0 %v1618
    %v1620 = vpop.xlane.xlu0 %1619
    %v1621 = vsel %vm1554, %v1477, -inf
    %1622 = vmax.xlane.f32.xlu0 %v1621
    %v1623 = vpop.xlane.xlu0 %1622
    %v1624 = vsel %vm1554, %v1480, -inf
    %1625 = vmax.xlane.f32.xlu0 %v1624
    %v1626 = vpop.xlane.xlu0 %1625
    %v1627 = vsel %vm1554, %v1483, -inf
    %1628 = vmax.xlane.f32.xlu0 %v1627
    %v1629 = vpop.xlane.xlu0 %1628
    %v1630 = vsel %vm1554, %v1486, -inf
    %1631 = vmax.xlane.f32.xlu0 %v1630
    %v1632 = vpop.xlane.xlu0 %1631
    %v1633 = vsel %vm1554, %v1489, -inf
    %1634 = vmax.xlane.f32.xlu0 %v1633
    %v1635 = vpop.xlane.xlu0 %1634
    %v1636 = vsel %vm1554, %v1492, -inf
    %1637 = vmax.xlane.f32.xlu0 %v1636
    %v1638 = vpop.xlane.xlu0 %1637
    %v1639 = vsel %vm1554, %v1495, -inf
    %1640 = vmax.xlane.f32.xlu0 %v1639
    %v1641 = vpop.xlane.xlu0 %1640
    %v1642 = vsel %vm1554, %v1498, -inf
    %1643 = vmax.xlane.f32.xlu0 %v1642
    %v1644 = vpop.xlane.xlu0 %1643
    %v1645 = vsel %vm1554, %v1501, -inf
    %1646 = vmax.xlane.f32.xlu0 %v1645
    %v1647 = vpop.xlane.xlu0 %1646
    %v1648 = vsel %vm1554, %v1504, -inf
    %1649 = vmax.xlane.f32.xlu0 %v1648
    %v1650 = vpop.xlane.xlu0 %1649
    %v1651 = vsel %vm1554, %v1507, -inf
    %1652 = vmax.xlane.f32.xlu0 %v1651
    %v1653 = vpop.xlane.xlu0 %1652
    %v1654 = vsel %vm1554, %v1510, -inf
    %1655 = vmax.xlane.f32.xlu0 %v1654
    %v1656 = vpop.xlane.xlu0 %1655
    %v1657 = vsel %vm1554, %v1513, -inf
    %1658 = vmax.xlane.f32.xlu0 %v1657
    %v1659 = vpop.xlane.xlu0 %1658
    %v1660 = vsel %vm1554, %v1516, -inf
    %1661 = vmax.xlane.f32.xlu0 %v1660
    %v1662 = vpop.xlane.xlu0 %1661
    %v1663 = vsel %vm1554, %v1519, -inf
    %1664 = vmax.xlane.f32.xlu0 %v1663
    %v1665 = vpop.xlane.xlu0 %1664
    %v1666 = vsel %vm1554, %v1522, -inf
    %1667 = vmax.xlane.f32.xlu0 %v1666
    %v1668 = vpop.xlane.xlu0 %1667
    %v1669 = vsel %vm1554, %v1525, -inf
    %1670 = vmax.xlane.f32.xlu0 %v1669
    %v1671 = vpop.xlane.xlu0 %1670
    %v1672 = vsel %vm1554, %v1528, -inf
    %1673 = vmax.xlane.f32.xlu0 %v1672
    %v1674 = vpop.xlane.xlu0 %1673
    %v1675 = vsel %vm1554, %v1531, -inf
    %1676 = vmax.xlane.f32.xlu0 %v1675
    %v1677 = vpop.xlane.xlu0 %1676
    %v1678 = vsel %vm1554, %v1534, -inf
    %1679 = vmax.xlane.f32.xlu0 %v1678
    %v1680 = vpop.xlane.xlu0 %1679
    %v1681 = vsel %vm1554, %v1537, -inf
    %1682 = vmax.xlane.f32.xlu0 %v1681
    %v1683 = vpop.xlane.xlu0 %1682
    %v1684 = vsel %vm1554, %v1540, -inf
    %1685 = vmax.xlane.f32.xlu0 %v1684
    %v1686 = vpop.xlane.xlu0 %1685
    %v1687 = vsel %vm1554, %v1543, -inf
    %1688 = vmax.xlane.f32.xlu0 %v1687
    %v1689 = vpop.xlane.xlu0 %1688
    %v1690 = vsel %vm1554, %v1546, -inf
    %1691 = vmax.xlane.f32.xlu0 %v1690
    %v1692 = vpop.xlane.xlu0 %1691
    %v1693 = vsel %vm1554, %v1549, -inf
    %1694 = vmax.xlane.f32.xlu0 %v1693
    %v1695 = vpop.xlane.xlu0 %1694
    %v1696 = vsel %vm1554, %v1552, -inf
    %1697 = vmax.xlane.f32.xlu0 %v1696
    %v1698 = vpop.xlane.xlu0 %1697
    %v1699 = vsub.f32 %v1411, %v1557
    %v1700 = vsub.f32 %v1414, %v1560
    %v1701 = vsub.f32 %v1417, %v1563
    %v1702 = vsub.f32 %v1420, %v1566
    %v1703 = vsub.f32 %v1423, %v1569
    %v1704 = vsub.f32 %v1426, %v1572
    %v1705 = vsub.f32 %v1429, %v1575
    %v1706 = vsub.f32 %v1432, %v1578
    %v1707 = vsub.f32 %v1435, %v1581
    %v1708 = vsub.f32 %v1438, %v1584
    %v1709 = vsub.f32 %v1441, %v1587
    %v1710 = vsub.f32 %v1444, %v1590
    %v1711 = vsub.f32 %v1447, %v1593
    %v1712 = vsub.f32 %v1450, %v1596
    %v1713 = vsub.f32 %v1453, %v1599
    %v1714 = vsub.f32 %v1456, %v1602
    %v1715 = vsub.f32 %v1459, %v1605
    %v1716 = vsub.f32 %v1462, %v1608
    %v1717 = vsub.f32 %v1465, %v1611
    %v1718 = vsub.f32 %v1468, %v1614
    %v1719 = vsub.f32 %v1471, %v1617
    %v1720 = vsub.f32 %v1474, %v1620
    %v1721 = vsub.f32 %v1477, %v1623
    %v1722 = vsub.f32 %v1480, %v1626
    %v1723 = vsub.f32 %v1483, %v1629
    %v1724 = vsub.f32 %v1486, %v1632
    %v1725 = vsub.f32 %v1489, %v1635
    %v1726 = vsub.f32 %v1492, %v1638
    %v1727 = vsub.f32 %v1495, %v1641
    %v1728 = vsub.f32 %v1498, %v1644
    %v1729 = vsub.f32 %v1501, %v1647
    %v1730 = vsub.f32 %v1504, %v1650
    %v1731 = vsub.f32 %v1507, %v1653
    %v1732 = vsub.f32 %v1510, %v1656
    %v1733 = vsub.f32 %v1513, %v1659
    %v1734 = vsub.f32 %v1516, %v1662
    %v1735 = vsub.f32 %v1519, %v1665
    %v1736 = vsub.f32 %v1522, %v1668
    %v1737 = vsub.f32 %v1525, %v1671
    %v1738 = vsub.f32 %v1528, %v1674
    %v1739 = vsub.f32 %v1531, %v1677
    %v1740 = vsub.f32 %v1534, %v1680
    %v1741 = vsub.f32 %v1537, %v1683
    %v1742 = vsub.f32 %v1540, %v1686
    %v1743 = vsub.f32 %v1543, %v1689
    %v1744 = vsub.f32 %v1546, %v1692
    %v1745 = vsub.f32 %v1549, %v1695
    %v1746 = vsub.f32 %v1552, %v1698
    %v1747 = vmul.f32 %v1699, 1.442695
    %v1748 = vpow.pop %v1747
    %v1749 = vmul.f32 %v1700, 1.442695
    %v1750 = vpow.pop %v1749
    %v1751 = vmul.f32 %v1701, 1.442695
    %v1752 = vpow.pop %v1751
    %v1753 = vmul.f32 %v1702, 1.442695
    %v1754 = vpow.pop %v1753
    %v1755 = vmul.f32 %v1703, 1.442695
    %v1756 = vpow.pop %v1755
    %v1757 = vmul.f32 %v1704, 1.442695
    %v1758 = vpow.pop %v1757
    %v1759 = vmul.f32 %v1705, 1.442695
    %v1760 = vpow.pop %v1759
    %v1761 = vmul.f32 %v1706, 1.442695
    %v1762 = vpow.pop %v1761
    %v1763 = vmul.f32 %v1707, 1.442695
    %v1764 = vpow.pop %v1763
    %v1765 = vmul.f32 %v1708, 1.442695
    %v1766 = vpow.pop %v1765
    %v1767 = vmul.f32 %v1709, 1.442695
    %v1768 = vpow.pop %v1767
    %v1769 = vmul.f32 %v1710, 1.442695
    %v1770 = vpow.pop %v1769
    %v1771 = vmul.f32 %v1711, 1.442695
    %v1772 = vpow.pop %v1771
    %v1773 = vmul.f32 %v1712, 1.442695
    %v1774 = vpow.pop %v1773
    %v1775 = vmul.f32 %v1713, 1.442695
    %v1776 = vpow.pop %v1775
    %v1777 = vmul.f32 %v1714, 1.442695
    %v1778 = vpow.pop %v1777
    %v1779 = vmul.f32 %v1715, 1.442695
    %v1780 = vpow.pop %v1779
    %v1781 = vmul.f32 %v1716, 1.442695
    %v1782 = vpow.pop %v1781
    %v1783 = vmul.f32 %v1717, 1.442695
    %v1784 = vpow.pop %v1783
    %v1785 = vmul.f32 %v1718, 1.442695
    %v1786 = vpow.pop %v1785
    %v1787 = vmul.f32 %v1719, 1.442695
    %v1788 = vpow.pop %v1787
    %v1789 = vmul.f32 %v1720, 1.442695
    %v1790 = vpow.pop %v1789
    %v1791 = vmul.f32 %v1721, 1.442695
    %v1792 = vpow.pop %v1791
    %v1793 = vmul.f32 %v1722, 1.442695
    %v1794 = vpow.pop %v1793
    %v1795 = vmul.f32 %v1723, 1.442695
    %v1796 = vpow.pop %v1795
    %v1797 = vmul.f32 %v1724, 1.442695
    %v1798 = vpow.pop %v1797
    %v1799 = vmul.f32 %v1725, 1.442695
    %v1800 = vpow.pop %v1799
    %v1801 = vmul.f32 %v1726, 1.442695
    %v1802 = vpow.pop %v1801
    %v1803 = vmul.f32 %v1727, 1.442695
    %v1804 = vpow.pop %v1803
    %v1805 = vmul.f32 %v1728, 1.442695
    %v1806 = vpow.pop %v1805
    %v1807 = vmul.f32 %v1729, 1.442695
    %v1808 = vpow.pop %v1807
    %v1809 = vmul.f32 %v1730, 1.442695
    %v1810 = vpow.pop %v1809
    %v1811 = vmul.f32 %v1731, 1.442695
    %v1812 = vpow.pop %v1811
    %v1813 = vmul.f32 %v1732, 1.442695
    %v1814 = vpow.pop %v1813
    %v1815 = vmul.f32 %v1733, 1.442695
    %v1816 = vpow.pop %v1815
    %v1817 = vmul.f32 %v1734, 1.442695
    %v1818 = vpow.pop %v1817
    %v1819 = vmul.f32 %v1735, 1.442695
    %v1820 = vpow.pop %v1819
    %v1821 = vmul.f32 %v1736, 1.442695
    %v1822 = vpow.pop %v1821
    %v1823 = vmul.f32 %v1737, 1.442695
    %v1824 = vpow.pop %v1823
    %v1825 = vmul.f32 %v1738, 1.442695
    %v1826 = vpow.pop %v1825
    %v1827 = vmul.f32 %v1739, 1.442695
    %v1828 = vpow.pop %v1827
    %v1829 = vmul.f32 %v1740, 1.442695
    %v1830 = vpow.pop %v1829
    %v1831 = vmul.f32 %v1741, 1.442695
    %v1832 = vpow.pop %v1831
    %v1833 = vmul.f32 %v1742, 1.442695
    %v1834 = vpow.pop %v1833
    %v1835 = vmul.f32 %v1743, 1.442695
    %v1836 = vpow.pop %v1835
    %v1837 = vmul.f32 %v1744, 1.442695
    %v1838 = vpow.pop %v1837
    %v1839 = vmul.f32 %v1745, 1.442695
    %v1840 = vpow.pop %v1839
    %v1841 = vmul.f32 %v1746, 1.442695
    %v1842 = vpow.pop %v1841
    %v1843 = vsel %vm1554, %v1748, 0.0
    %1844 = vadd.xlane.f32.xlu0 %v1843
    %v1845 = vpop.xlane.xlu0 %1844
    %v1846 = vsel %vm1554, %v1750, 0.0
    %1847 = vadd.xlane.f32.xlu0 %v1846
    %v1848 = vpop.xlane.xlu0 %1847
    %v1849 = vsel %vm1554, %v1752, 0.0
    %1850 = vadd.xlane.f32.xlu0 %v1849
    %v1851 = vpop.xlane.xlu0 %1850
    %v1852 = vsel %vm1554, %v1754, 0.0
    %1853 = vadd.xlane.f32.xlu0 %v1852
    %v1854 = vpop.xlane.xlu0 %1853
    %v1855 = vsel %vm1554, %v1756, 0.0
    %1856 = vadd.xlane.f32.xlu0 %v1855
    %v1857 = vpop.xlane.xlu0 %1856
    %v1858 = vsel %vm1554, %v1758, 0.0
    %1859 = vadd.xlane.f32.xlu0 %v1858
    %v1860 = vpop.xlane.xlu0 %1859
    %v1861 = vsel %vm1554, %v1760, 0.0
    %1862 = vadd.xlane.f32.xlu0 %v1861
    %v1863 = vpop.xlane.xlu0 %1862
    %v1864 = vsel %vm1554, %v1762, 0.0
    %1865 = vadd.xlane.f32.xlu0 %v1864
    %v1866 = vpop.xlane.xlu0 %1865
    %v1867 = vsel %vm1554, %v1764, 0.0
    %1868 = vadd.xlane.f32.xlu0 %v1867
    %v1869 = vpop.xlane.xlu0 %1868
    %v1870 = vsel %vm1554, %v1766, 0.0
    %1871 = vadd.xlane.f32.xlu0 %v1870
    %v1872 = vpop.xlane.xlu0 %1871
    %v1873 = vsel %vm1554, %v1768, 0.0
    %1874 = vadd.xlane.f32.xlu0 %v1873
    %v1875 = vpop.xlane.xlu0 %1874
    %v1876 = vsel %vm1554, %v1770, 0.0
    %1877 = vadd.xlane.f32.xlu0 %v1876
    %v1878 = vpop.xlane.xlu0 %1877
    %v1879 = vsel %vm1554, %v1772, 0.0
    %1880 = vadd.xlane.f32.xlu0 %v1879
    %v1881 = vpop.xlane.xlu0 %1880
    %v1882 = vsel %vm1554, %v1774, 0.0
    %1883 = vadd.xlane.f32.xlu0 %v1882
    %v1884 = vpop.xlane.xlu0 %1883
    %v1885 = vsel %vm1554, %v1776, 0.0
    %1886 = vadd.xlane.f32.xlu0 %v1885
    %v1887 = vpop.xlane.xlu0 %1886
    %v1888 = vsel %vm1554, %v1778, 0.0
    %1889 = vadd.xlane.f32.xlu0 %v1888
    %v1890 = vpop.xlane.xlu0 %1889
    %v1891 = vsel %vm1554, %v1780, 0.0
    %1892 = vadd.xlane.f32.xlu0 %v1891
    %v1893 = vpop.xlane.xlu0 %1892
    %v1894 = vsel %vm1554, %v1782, 0.0
    %1895 = vadd.xlane.f32.xlu0 %v1894
    %v1896 = vpop.xlane.xlu0 %1895
    %v1897 = vsel %vm1554, %v1784, 0.0
    %1898 = vadd.xlane.f32.xlu0 %v1897
    %v1899 = vpop.xlane.xlu0 %1898
    %v1900 = vsel %vm1554, %v1786, 0.0
    %1901 = vadd.xlane.f32.xlu0 %v1900
    %v1902 = vpop.xlane.xlu0 %1901
    %v1903 = vsel %vm1554, %v1788, 0.0
    %1904 = vadd.xlane.f32.xlu0 %v1903
    %v1905 = vpop.xlane.xlu0 %1904
    %v1906 = vsel %vm1554, %v1790, 0.0
    %1907 = vadd.xlane.f32.xlu0 %v1906
    %v1908 = vpop.xlane.xlu0 %1907
    %v1909 = vsel %vm1554, %v1792, 0.0
    %1910 = vadd.xlane.f32.xlu0 %v1909
    %v1911 = vpop.xlane.xlu0 %1910
    %v1912 = vsel %vm1554, %v1794, 0.0
    %1913 = vadd.xlane.f32.xlu0 %v1912
    %v1914 = vpop.xlane.xlu0 %1913
    %v1915 = vsel %vm1554, %v1796, 0.0
    %1916 = vadd.xlane.f32.xlu0 %v1915
    %v1917 = vpop.xlane.xlu0 %1916
    %v1918 = vsel %vm1554, %v1798, 0.0
    %1919 = vadd.xlane.f32.xlu0 %v1918
    %v1920 = vpop.xlane.xlu0 %1919
    %v1921 = vsel %vm1554, %v1800, 0.0
    %1922 = vadd.xlane.f32.xlu0 %v1921
    %v1923 = vpop.xlane.xlu0 %1922
    %v1924 = vsel %vm1554, %v1802, 0.0
    %1925 = vadd.xlane.f32.xlu0 %v1924
    %v1926 = vpop.xlane.xlu0 %1925
    %v1927 = vsel %vm1554, %v1804, 0.0
    %1928 = vadd.xlane.f32.xlu0 %v1927
    %v1929 = vpop.xlane.xlu0 %1928
    %v1930 = vsel %vm1554, %v1806, 0.0
    %1931 = vadd.xlane.f32.xlu0 %v1930
    %v1932 = vpop.xlane.xlu0 %1931
    %v1933 = vsel %vm1554, %v1808, 0.0
    %1934 = vadd.xlane.f32.xlu0 %v1933
    %v1935 = vpop.xlane.xlu0 %1934
    %v1936 = vsel %vm1554, %v1810, 0.0
    %1937 = vadd.xlane.f32.xlu0 %v1936
    %v1938 = vpop.xlane.xlu0 %1937
    %v1939 = vsel %vm1554, %v1812, 0.0
    %1940 = vadd.xlane.f32.xlu0 %v1939
    %v1941 = vpop.xlane.xlu0 %1940
    %v1942 = vsel %vm1554, %v1814, 0.0
    %1943 = vadd.xlane.f32.xlu0 %v1942
    %v1944 = vpop.xlane.xlu0 %1943
    %v1945 = vsel %vm1554, %v1816, 0.0
    %1946 = vadd.xlane.f32.xlu0 %v1945
    %v1947 = vpop.xlane.xlu0 %1946
    %v1948 = vsel %vm1554, %v1818, 0.0
    %1949 = vadd.xlane.f32.xlu0 %v1948
    %v1950 = vpop.xlane.xlu0 %1949
    %v1951 = vsel %vm1554, %v1820, 0.0
    %1952 = vadd.xlane.f32.xlu0 %v1951
    %v1953 = vpop.xlane.xlu0 %1952
    %v1954 = vsel %vm1554, %v1822, 0.0
    %1955 = vadd.xlane.f32.xlu0 %v1954
    %v1956 = vpop.xlane.xlu0 %1955
    %v1957 = vsel %vm1554, %v1824, 0.0
    %1958 = vadd.xlane.f32.xlu0 %v1957
    %v1959 = vpop.xlane.xlu0 %1958
    %v1960 = vsel %vm1554, %v1826, 0.0
    %1961 = vadd.xlane.f32.xlu0 %v1960
    %v1962 = vpop.xlane.xlu0 %1961
    %v1963 = vsel %vm1554, %v1828, 0.0
    %1964 = vadd.xlane.f32.xlu0 %v1963
    %v1965 = vpop.xlane.xlu0 %1964
    %v1966 = vsel %vm1554, %v1830, 0.0
    %1967 = vadd.xlane.f32.xlu0 %v1966
    %v1968 = vpop.xlane.xlu0 %1967
    %v1969 = vsel %vm1554, %v1832, 0.0
    %1970 = vadd.xlane.f32.xlu0 %v1969
    %v1971 = vpop.xlane.xlu0 %1970
    %v1972 = vsel %vm1554, %v1834, 0.0
    %1973 = vadd.xlane.f32.xlu0 %v1972
    %v1974 = vpop.xlane.xlu0 %1973
    %v1975 = vsel %vm1554, %v1836, 0.0
    %1976 = vadd.xlane.f32.xlu0 %v1975
    %v1977 = vpop.xlane.xlu0 %1976
    %v1978 = vsel %vm1554, %v1838, 0.0
    %1979 = vadd.xlane.f32.xlu0 %v1978
    %v1980 = vpop.xlane.xlu0 %1979
    %v1981 = vsel %vm1554, %v1840, 0.0
    %1982 = vadd.xlane.f32.xlu0 %v1981
    %v1983 = vpop.xlane.xlu0 %1982
    %v1984 = vsel %vm1554, %v1842, 0.0
    %1985 = vadd.xlane.f32.xlu0 %v1984
    %v1986 = vpop.xlane.xlu0 %1985
    %v1987 = vrcp.pop %v1845
    %v1988 = vmul.f32 %v1845, %v1987
    %v1989 = vsub.f32 1.0, %v1988
    %v1990 = vmul.f32 %v1987, %v1989
    %v1991 = vadd.f32 %v1987, %v1990
    %vm1992 = vweird.f32 %v1845
    %vm1993 = vweird.f32 %v1987
    %vm1994 = vmor %vm1992, %vm1993
    %v1995 = vsel %vm1994, %v1987, %v1991
    %v1996 = vand.u32 2147483647, %v1845
    %vm1997 = vcmp.eq.f32.partialorder %v1996, 8.507059e+37
    %v1998 = vand.u32 %v1845, 2147483648
    %v1999 = vor.u32 1.1754944e-38, %v1998
    %v2000 = vsel %vm1997, %v1999, %v1995
    %v2001 = vmul.f32 %v1748, %v2000
    %v2002 = vrcp.pop %v1848
    %v2003 = vmul.f32 %v1848, %v2002
    %v2004 = vsub.f32 1.0, %v2003
    %v2005 = vmul.f32 %v2002, %v2004
    %v2006 = vadd.f32 %v2002, %v2005
    %vm2007 = vweird.f32 %v1848
    %vm2008 = vweird.f32 %v2002
    %vm2009 = vmor %vm2007, %vm2008
    %v2010 = vsel %vm2009, %v2002, %v2006
    %v2011 = vand.u32 2147483647, %v1848
    %vm2012 = vcmp.eq.f32.partialorder %v2011, 8.507059e+37
    %v2013 = vand.u32 %v1848, 2147483648
    %v2014 = vor.u32 1.1754944e-38, %v2013
    %v2015 = vsel %vm2012, %v2014, %v2010
    %v2016 = vmul.f32 %v1750, %v2015
    %v2017 = vrcp.pop %v1851
    %v2018 = vmul.f32 %v1851, %v2017
    %v2019 = vsub.f32 1.0, %v2018
    %v2020 = vmul.f32 %v2017, %v2019
    %v2021 = vadd.f32 %v2017, %v2020
    %vm2022 = vweird.f32 %v1851
    %vm2023 = vweird.f32 %v2017
    %vm2024 = vmor %vm2022, %vm2023
    %v2025 = vsel %vm2024, %v2017, %v2021
    %v2026 = vand.u32 2147483647, %v1851
    %vm2027 = vcmp.eq.f32.partialorder %v2026, 8.507059e+37
    %v2028 = vand.u32 %v1851, 2147483648
    %v2029 = vor.u32 1.1754944e-38, %v2028
    %v2030 = vsel %vm2027, %v2029, %v2025
    %v2031 = vmul.f32 %v1752, %v2030
    %v2032 = vrcp.pop %v1854
    %v2033 = vmul.f32 %v1854, %v2032
    %v2034 = vsub.f32 1.0, %v2033
    %v2035 = vmul.f32 %v2032, %v2034
    %v2036 = vadd.f32 %v2032, %v2035
    %vm2037 = vweird.f32 %v1854
    %vm2038 = vweird.f32 %v2032
    %vm2039 = vmor %vm2037, %vm2038
    %v2040 = vsel %vm2039, %v2032, %v2036
    %v2041 = vand.u32 2147483647, %v1854
    %vm2042 = vcmp.eq.f32.partialorder %v2041, 8.507059e+37
    %v2043 = vand.u32 %v1854, 2147483648
    %v2044 = vor.u32 1.1754944e-38, %v2043
    %v2045 = vsel %vm2042, %v2044, %v2040
    %v2046 = vmul.f32 %v1754, %v2045
    %v2047 = vrcp.pop %v1857
    %v2048 = vmul.f32 %v1857, %v2047
    %v2049 = vsub.f32 1.0, %v2048
    %v2050 = vmul.f32 %v2047, %v2049
    %v2051 = vadd.f32 %v2047, %v2050
    %vm2052 = vweird.f32 %v1857
    %vm2053 = vweird.f32 %v2047
    %vm2054 = vmor %vm2052, %vm2053
    %v2055 = vsel %vm2054, %v2047, %v2051
    %v2056 = vand.u32 2147483647, %v1857
    %vm2057 = vcmp.eq.f32.partialorder %v2056, 8.507059e+37
    %v2058 = vand.u32 %v1857, 2147483648
    %v2059 = vor.u32 1.1754944e-38, %v2058
    %v2060 = vsel %vm2057, %v2059, %v2055
    %v2061 = vmul.f32 %v1756, %v2060
    %v2062 = vrcp.pop %v1860
    %v2063 = vmul.f32 %v1860, %v2062
    %v2064 = vsub.f32 1.0, %v2063
    %v2065 = vmul.f32 %v2062, %v2064
    %v2066 = vadd.f32 %v2062, %v2065
    %vm2067 = vweird.f32 %v1860
    %vm2068 = vweird.f32 %v2062
    %vm2069 = vmor %vm2067, %vm2068
    %v2070 = vsel %vm2069, %v2062, %v2066
    %v2071 = vand.u32 2147483647, %v1860
    %vm2072 = vcmp.eq.f32.partialorder %v2071, 8.507059e+37
    %v2073 = vand.u32 %v1860, 2147483648
    %v2074 = vor.u32 1.1754944e-38, %v2073
    %v2075 = vsel %vm2072, %v2074, %v2070
    %v2076 = vmul.f32 %v1758, %v2075
    %v2077 = vrcp.pop %v1863
    %v2078 = vmul.f32 %v1863, %v2077
    %v2079 = vsub.f32 1.0, %v2078
    %v2080 = vmul.f32 %v2077, %v2079
    %v2081 = vadd.f32 %v2077, %v2080
    %vm2082 = vweird.f32 %v1863
    %vm2083 = vweird.f32 %v2077
    %vm2084 = vmor %vm2082, %vm2083
    %v2085 = vsel %vm2084, %v2077, %v2081
    %v2086 = vand.u32 2147483647, %v1863
    %vm2087 = vcmp.eq.f32.partialorder %v2086, 8.507059e+37
    %v2088 = vand.u32 %v1863, 2147483648
    %v2089 = vor.u32 1.1754944e-38, %v2088
    %v2090 = vsel %vm2087, %v2089, %v2085
    %v2091 = vmul.f32 %v1760, %v2090
    %v2092 = vrcp.pop %v1866
    %v2093 = vmul.f32 %v1866, %v2092
    %v2094 = vsub.f32 1.0, %v2093
    %v2095 = vmul.f32 %v2092, %v2094
    %v2096 = vadd.f32 %v2092, %v2095
    %vm2097 = vweird.f32 %v1866
    %vm2098 = vweird.f32 %v2092
    %vm2099 = vmor %vm2097, %vm2098
    %v2100 = vsel %vm2099, %v2092, %v2096
    %v2101 = vand.u32 2147483647, %v1866
    %vm2102 = vcmp.eq.f32.partialorder %v2101, 8.507059e+37
    %v2103 = vand.u32 %v1866, 2147483648
    %v2104 = vor.u32 1.1754944e-38, %v2103
    %v2105 = vsel %vm2102, %v2104, %v2100
    %v2106 = vmul.f32 %v1762, %v2105
    %v2107 = vrcp.pop %v1869
    %v2108 = vmul.f32 %v1869, %v2107
    %v2109 = vsub.f32 1.0, %v2108
    %v2110 = vmul.f32 %v2107, %v2109
    %v2111 = vadd.f32 %v2107, %v2110
    %vm2112 = vweird.f32 %v1869
    %vm2113 = vweird.f32 %v2107
    %vm2114 = vmor %vm2112, %vm2113
    %v2115 = vsel %vm2114, %v2107, %v2111
    %v2116 = vand.u32 2147483647, %v1869
    %vm2117 = vcmp.eq.f32.partialorder %v2116, 8.507059e+37
    %v2118 = vand.u32 %v1869, 2147483648
    %v2119 = vor.u32 1.1754944e-38, %v2118
    %v2120 = vsel %vm2117, %v2119, %v2115
    %v2121 = vmul.f32 %v1764, %v2120
    %v2122 = vrcp.pop %v1872
    %v2123 = vmul.f32 %v1872, %v2122
    %v2124 = vsub.f32 1.0, %v2123
    %v2125 = vmul.f32 %v2122, %v2124
    %v2126 = vadd.f32 %v2122, %v2125
    %vm2127 = vweird.f32 %v1872
    %vm2128 = vweird.f32 %v2122
    %vm2129 = vmor %vm2127, %vm2128
    %v2130 = vsel %vm2129, %v2122, %v2126
    %v2131 = vand.u32 2147483647, %v1872
    %vm2132 = vcmp.eq.f32.partialorder %v2131, 8.507059e+37
    %v2133 = vand.u32 %v1872, 2147483648
    %v2134 = vor.u32 1.1754944e-38, %v2133
    %v2135 = vsel %vm2132, %v2134, %v2130
    %v2136 = vmul.f32 %v1766, %v2135
    %v2137 = vrcp.pop %v1875
    %v2138 = vmul.f32 %v1875, %v2137
    %v2139 = vsub.f32 1.0, %v2138
    %v2140 = vmul.f32 %v2137, %v2139
    %v2141 = vadd.f32 %v2137, %v2140
    %vm2142 = vweird.f32 %v1875
    %vm2143 = vweird.f32 %v2137
    %vm2144 = vmor %vm2142, %vm2143
    %v2145 = vsel %vm2144, %v2137, %v2141
    %v2146 = vand.u32 2147483647, %v1875
    %vm2147 = vcmp.eq.f32.partialorder %v2146, 8.507059e+37
    %v2148 = vand.u32 %v1875, 2147483648
    %v2149 = vor.u32 1.1754944e-38, %v2148
    %v2150 = vsel %vm2147, %v2149, %v2145
    %v2151 = vmul.f32 %v1768, %v2150
    %v2152 = vrcp.pop %v1878
    %v2153 = vmul.f32 %v1878, %v2152
    %v2154 = vsub.f32 1.0, %v2153
    %v2155 = vmul.f32 %v2152, %v2154
    %v2156 = vadd.f32 %v2152, %v2155
    %vm2157 = vweird.f32 %v1878
    %vm2158 = vweird.f32 %v2152
    %vm2159 = vmor %vm2157, %vm2158
    %v2160 = vsel %vm2159, %v2152, %v2156
    %v2161 = vand.u32 2147483647, %v1878
    %vm2162 = vcmp.eq.f32.partialorder %v2161, 8.507059e+37
    %v2163 = vand.u32 %v1878, 2147483648
    %v2164 = vor.u32 1.1754944e-38, %v2163
    %v2165 = vsel %vm2162, %v2164, %v2160
    %v2166 = vmul.f32 %v1770, %v2165
    %v2167 = vrcp.pop %v1881
    %v2168 = vmul.f32 %v1881, %v2167
    %v2169 = vsub.f32 1.0, %v2168
    %v2170 = vmul.f32 %v2167, %v2169
    %v2171 = vadd.f32 %v2167, %v2170
    %vm2172 = vweird.f32 %v1881
    %vm2173 = vweird.f32 %v2167
    %vm2174 = vmor %vm2172, %vm2173
    %v2175 = vsel %vm2174, %v2167, %v2171
    %v2176 = vand.u32 2147483647, %v1881
    %vm2177 = vcmp.eq.f32.partialorder %v2176, 8.507059e+37
    %v2178 = vand.u32 %v1881, 2147483648
    %v2179 = vor.u32 1.1754944e-38, %v2178
    %v2180 = vsel %vm2177, %v2179, %v2175
    %v2181 = vmul.f32 %v1772, %v2180
    %v2182 = vrcp.pop %v1884
    %v2183 = vmul.f32 %v1884, %v2182
    %v2184 = vsub.f32 1.0, %v2183
    %v2185 = vmul.f32 %v2182, %v2184
    %v2186 = vadd.f32 %v2182, %v2185
    %vm2187 = vweird.f32 %v1884
    %vm2188 = vweird.f32 %v2182
    %vm2189 = vmor %vm2187, %vm2188
    %v2190 = vsel %vm2189, %v2182, %v2186
    %v2191 = vand.u32 2147483647, %v1884
    %vm2192 = vcmp.eq.f32.partialorder %v2191, 8.507059e+37
    %v2193 = vand.u32 %v1884, 2147483648
    %v2194 = vor.u32 1.1754944e-38, %v2193
    %v2195 = vsel %vm2192, %v2194, %v2190
    %v2196 = vmul.f32 %v1774, %v2195
    %v2197 = vrcp.pop %v1887
    %v2198 = vmul.f32 %v1887, %v2197
    %v2199 = vsub.f32 1.0, %v2198
    %v2200 = vmul.f32 %v2197, %v2199
    %v2201 = vadd.f32 %v2197, %v2200
    %vm2202 = vweird.f32 %v1887
    %vm2203 = vweird.f32 %v2197
    %vm2204 = vmor %vm2202, %vm2203
    %v2205 = vsel %vm2204, %v2197, %v2201
    %v2206 = vand.u32 2147483647, %v1887
    %vm2207 = vcmp.eq.f32.partialorder %v2206, 8.507059e+37
    %v2208 = vand.u32 %v1887, 2147483648
    %v2209 = vor.u32 1.1754944e-38, %v2208
    %v2210 = vsel %vm2207, %v2209, %v2205
    %v2211 = vmul.f32 %v1776, %v2210
    %v2212 = vrcp.pop %v1890
    %v2213 = vmul.f32 %v1890, %v2212
    %v2214 = vsub.f32 1.0, %v2213
    %v2215 = vmul.f32 %v2212, %v2214
    %v2216 = vadd.f32 %v2212, %v2215
    %vm2217 = vweird.f32 %v1890
    %vm2218 = vweird.f32 %v2212
    %vm2219 = vmor %vm2217, %vm2218
    %v2220 = vsel %vm2219, %v2212, %v2216
    %v2221 = vand.u32 2147483647, %v1890
    %vm2222 = vcmp.eq.f32.partialorder %v2221, 8.507059e+37
    %v2223 = vand.u32 %v1890, 2147483648
    %v2224 = vor.u32 1.1754944e-38, %v2223
    %v2225 = vsel %vm2222, %v2224, %v2220
    %v2226 = vmul.f32 %v1778, %v2225
    %v2227 = vrcp.pop %v1893
    %v2228 = vmul.f32 %v1893, %v2227
    %v2229 = vsub.f32 1.0, %v2228
    %v2230 = vmul.f32 %v2227, %v2229
    %v2231 = vadd.f32 %v2227, %v2230
    %vm2232 = vweird.f32 %v1893
    %vm2233 = vweird.f32 %v2227
    %vm2234 = vmor %vm2232, %vm2233
    %v2235 = vsel %vm2234, %v2227, %v2231
    %v2236 = vand.u32 2147483647, %v1893
    %vm2237 = vcmp.eq.f32.partialorder %v2236, 8.507059e+37
    %v2238 = vand.u32 %v1893, 2147483648
    %v2239 = vor.u32 1.1754944e-38, %v2238
    %v2240 = vsel %vm2237, %v2239, %v2235
    %v2241 = vmul.f32 %v1780, %v2240
    %v2242 = vrcp.pop %v1896
    %v2243 = vmul.f32 %v1896, %v2242
    %v2244 = vsub.f32 1.0, %v2243
    %v2245 = vmul.f32 %v2242, %v2244
    %v2246 = vadd.f32 %v2242, %v2245
    %vm2247 = vweird.f32 %v1896
    %vm2248 = vweird.f32 %v2242
    %vm2249 = vmor %vm2247, %vm2248
    %v2250 = vsel %vm2249, %v2242, %v2246
    %v2251 = vand.u32 2147483647, %v1896
    %vm2252 = vcmp.eq.f32.partialorder %v2251, 8.507059e+37
    %v2253 = vand.u32 %v1896, 2147483648
    %v2254 = vor.u32 1.1754944e-38, %v2253
    %v2255 = vsel %vm2252, %v2254, %v2250
    %v2256 = vmul.f32 %v1782, %v2255
    %v2257 = vrcp.pop %v1899
    %v2258 = vmul.f32 %v1899, %v2257
    %v2259 = vsub.f32 1.0, %v2258
    %v2260 = vmul.f32 %v2257, %v2259
    %v2261 = vadd.f32 %v2257, %v2260
    %vm2262 = vweird.f32 %v1899
    %vm2263 = vweird.f32 %v2257
    %vm2264 = vmor %vm2262, %vm2263
    %v2265 = vsel %vm2264, %v2257, %v2261
    %v2266 = vand.u32 2147483647, %v1899
    %vm2267 = vcmp.eq.f32.partialorder %v2266, 8.507059e+37
    %v2268 = vand.u32 %v1899, 2147483648
    %v2269 = vor.u32 1.1754944e-38, %v2268
    %v2270 = vsel %vm2267, %v2269, %v2265
    %v2271 = vmul.f32 %v1784, %v2270
    %v2272 = vrcp.pop %v1902
    %v2273 = vmul.f32 %v1902, %v2272
    %v2274 = vsub.f32 1.0, %v2273
    %v2275 = vmul.f32 %v2272, %v2274
    %v2276 = vadd.f32 %v2272, %v2275
    %vm2277 = vweird.f32 %v1902
    %vm2278 = vweird.f32 %v2272
    %vm2279 = vmor %vm2277, %vm2278
    %v2280 = vsel %vm2279, %v2272, %v2276
    %v2281 = vand.u32 2147483647, %v1902
    %vm2282 = vcmp.eq.f32.partialorder %v2281, 8.507059e+37
    %v2283 = vand.u32 %v1902, 2147483648
    %v2284 = vor.u32 1.1754944e-38, %v2283
    %v2285 = vsel %vm2282, %v2284, %v2280
    %v2286 = vmul.f32 %v1786, %v2285
    %v2287 = vrcp.pop %v1905
    %v2288 = vmul.f32 %v1905, %v2287
    %v2289 = vsub.f32 1.0, %v2288
    %v2290 = vmul.f32 %v2287, %v2289
    %v2291 = vadd.f32 %v2287, %v2290
    %vm2292 = vweird.f32 %v1905
    %vm2293 = vweird.f32 %v2287
    %vm2294 = vmor %vm2292, %vm2293
    %v2295 = vsel %vm2294, %v2287, %v2291
    %v2296 = vand.u32 2147483647, %v1905
    %vm2297 = vcmp.eq.f32.partialorder %v2296, 8.507059e+37
    %v2298 = vand.u32 %v1905, 2147483648
    %v2299 = vor.u32 1.1754944e-38, %v2298
    %v2300 = vsel %vm2297, %v2299, %v2295
    %v2301 = vmul.f32 %v1788, %v2300
    %v2302 = vrcp.pop %v1908
    %v2303 = vmul.f32 %v1908, %v2302
    %v2304 = vsub.f32 1.0, %v2303
    %v2305 = vmul.f32 %v2302, %v2304
    %v2306 = vadd.f32 %v2302, %v2305
    %vm2307 = vweird.f32 %v1908
    %vm2308 = vweird.f32 %v2302
    %vm2309 = vmor %vm2307, %vm2308
    %v2310 = vsel %vm2309, %v2302, %v2306
    %v2311 = vand.u32 2147483647, %v1908
    %vm2312 = vcmp.eq.f32.partialorder %v2311, 8.507059e+37
    %v2313 = vand.u32 %v1908, 2147483648
    %v2314 = vor.u32 1.1754944e-38, %v2313
    %v2315 = vsel %vm2312, %v2314, %v2310
    %v2316 = vmul.f32 %v1790, %v2315
    %v2317 = vrcp.pop %v1911
    %v2318 = vmul.f32 %v1911, %v2317
    %v2319 = vsub.f32 1.0, %v2318
    %v2320 = vmul.f32 %v2317, %v2319
    %v2321 = vadd.f32 %v2317, %v2320
    %vm2322 = vweird.f32 %v1911
    %vm2323 = vweird.f32 %v2317
    %vm2324 = vmor %vm2322, %vm2323
    %v2325 = vsel %vm2324, %v2317, %v2321
    %v2326 = vand.u32 2147483647, %v1911
    %vm2327 = vcmp.eq.f32.partialorder %v2326, 8.507059e+37
    %v2328 = vand.u32 %v1911, 2147483648
    %v2329 = vor.u32 1.1754944e-38, %v2328
    %v2330 = vsel %vm2327, %v2329, %v2325
    %v2331 = vmul.f32 %v1792, %v2330
    %v2332 = vrcp.pop %v1914
    %v2333 = vmul.f32 %v1914, %v2332
    %v2334 = vsub.f32 1.0, %v2333
    %v2335 = vmul.f32 %v2332, %v2334
    %v2336 = vadd.f32 %v2332, %v2335
    %vm2337 = vweird.f32 %v1914
    %vm2338 = vweird.f32 %v2332
    %vm2339 = vmor %vm2337, %vm2338
    %v2340 = vsel %vm2339, %v2332, %v2336
    %v2341 = vand.u32 2147483647, %v1914
    %vm2342 = vcmp.eq.f32.partialorder %v2341, 8.507059e+37
    %v2343 = vand.u32 %v1914, 2147483648
    %v2344 = vor.u32 1.1754944e-38, %v2343
    %v2345 = vsel %vm2342, %v2344, %v2340
    %v2346 = vmul.f32 %v1794, %v2345
    %v2347 = vrcp.pop %v1917
    %v2348 = vmul.f32 %v1917, %v2347
    %v2349 = vsub.f32 1.0, %v2348
    %v2350 = vmul.f32 %v2347, %v2349
    %v2351 = vadd.f32 %v2347, %v2350
    %vm2352 = vweird.f32 %v1917
    %vm2353 = vweird.f32 %v2347
    %vm2354 = vmor %vm2352, %vm2353
    %v2355 = vsel %vm2354, %v2347, %v2351
    %v2356 = vand.u32 2147483647, %v1917
    %vm2357 = vcmp.eq.f32.partialorder %v2356, 8.507059e+37
    %v2358 = vand.u32 %v1917, 2147483648
    %v2359 = vor.u32 1.1754944e-38, %v2358
    %v2360 = vsel %vm2357, %v2359, %v2355
    %v2361 = vmul.f32 %v1796, %v2360
    %v2362 = vrcp.pop %v1920
    %v2363 = vmul.f32 %v1920, %v2362
    %v2364 = vsub.f32 1.0, %v2363
    %v2365 = vmul.f32 %v2362, %v2364
    %v2366 = vadd.f32 %v2362, %v2365
    %vm2367 = vweird.f32 %v1920
    %vm2368 = vweird.f32 %v2362
    %vm2369 = vmor %vm2367, %vm2368
    %v2370 = vsel %vm2369, %v2362, %v2366
    %v2371 = vand.u32 2147483647, %v1920
    %vm2372 = vcmp.eq.f32.partialorder %v2371, 8.507059e+37
    %v2373 = vand.u32 %v1920, 2147483648
    %v2374 = vor.u32 1.1754944e-38, %v2373
    %v2375 = vsel %vm2372, %v2374, %v2370
    %v2376 = vmul.f32 %v1798, %v2375
    %v2377 = vrcp.pop %v1923
    %v2378 = vmul.f32 %v1923, %v2377
    %v2379 = vsub.f32 1.0, %v2378
    %v2380 = vmul.f32 %v2377, %v2379
    %v2381 = vadd.f32 %v2377, %v2380
    %vm2382 = vweird.f32 %v1923
    %vm2383 = vweird.f32 %v2377
    %vm2384 = vmor %vm2382, %vm2383
    %v2385 = vsel %vm2384, %v2377, %v2381
    %v2386 = vand.u32 2147483647, %v1923
    %vm2387 = vcmp.eq.f32.partialorder %v2386, 8.507059e+37
    %v2388 = vand.u32 %v1923, 2147483648
    %v2389 = vor.u32 1.1754944e-38, %v2388
    %v2390 = vsel %vm2387, %v2389, %v2385
    %v2391 = vmul.f32 %v1800, %v2390
    %v2392 = vrcp.pop %v1926
    %v2393 = vmul.f32 %v1926, %v2392
    %v2394 = vsub.f32 1.0, %v2393
    %v2395 = vmul.f32 %v2392, %v2394
    %v2396 = vadd.f32 %v2392, %v2395
    %vm2397 = vweird.f32 %v1926
    %vm2398 = vweird.f32 %v2392
    %vm2399 = vmor %vm2397, %vm2398
    %v2400 = vsel %vm2399, %v2392, %v2396
    %v2401 = vand.u32 2147483647, %v1926
    %vm2402 = vcmp.eq.f32.partialorder %v2401, 8.507059e+37
    %v2403 = vand.u32 %v1926, 2147483648
    %v2404 = vor.u32 1.1754944e-38, %v2403
    %v2405 = vsel %vm2402, %v2404, %v2400
    %v2406 = vmul.f32 %v1802, %v2405
    %v2407 = vrcp.pop %v1929
    %v2408 = vmul.f32 %v1929, %v2407
    %v2409 = vsub.f32 1.0, %v2408
    %v2410 = vmul.f32 %v2407, %v2409
    %v2411 = vadd.f32 %v2407, %v2410
    %vm2412 = vweird.f32 %v1929
    %vm2413 = vweird.f32 %v2407
    %vm2414 = vmor %vm2412, %vm2413
    %v2415 = vsel %vm2414, %v2407, %v2411
    %v2416 = vand.u32 2147483647, %v1929
    %vm2417 = vcmp.eq.f32.partialorder %v2416, 8.507059e+37
    %v2418 = vand.u32 %v1929, 2147483648
    %v2419 = vor.u32 1.1754944e-38, %v2418
    %v2420 = vsel %vm2417, %v2419, %v2415
    %v2421 = vmul.f32 %v1804, %v2420
    %v2422 = vrcp.pop %v1932
    %v2423 = vmul.f32 %v1932, %v2422
    %v2424 = vsub.f32 1.0, %v2423
    %v2425 = vmul.f32 %v2422, %v2424
    %v2426 = vadd.f32 %v2422, %v2425
    %vm2427 = vweird.f32 %v1932
    %vm2428 = vweird.f32 %v2422
    %vm2429 = vmor %vm2427, %vm2428
    %v2430 = vsel %vm2429, %v2422, %v2426
    %v2431 = vand.u32 2147483647, %v1932
    %vm2432 = vcmp.eq.f32.partialorder %v2431, 8.507059e+37
    %v2433 = vand.u32 %v1932, 2147483648
    %v2434 = vor.u32 1.1754944e-38, %v2433
    %v2435 = vsel %vm2432, %v2434, %v2430
    %v2436 = vmul.f32 %v1806, %v2435
    %v2437 = vrcp.pop %v1935
    %v2438 = vmul.f32 %v1935, %v2437
    %v2439 = vsub.f32 1.0, %v2438
    %v2440 = vmul.f32 %v2437, %v2439
    %v2441 = vadd.f32 %v2437, %v2440
    %vm2442 = vweird.f32 %v1935
    %vm2443 = vweird.f32 %v2437
    %vm2444 = vmor %vm2442, %vm2443
    %v2445 = vsel %vm2444, %v2437, %v2441
    %v2446 = vand.u32 2147483647, %v1935
    %vm2447 = vcmp.eq.f32.partialorder %v2446, 8.507059e+37
    %v2448 = vand.u32 %v1935, 2147483648
    %v2449 = vor.u32 1.1754944e-38, %v2448
    %v2450 = vsel %vm2447, %v2449, %v2445
    %v2451 = vmul.f32 %v1808, %v2450
    %v2452 = vrcp.pop %v1938
    %v2453 = vmul.f32 %v1938, %v2452
    %v2454 = vsub.f32 1.0, %v2453
    %v2455 = vmul.f32 %v2452, %v2454
    %v2456 = vadd.f32 %v2452, %v2455
    %vm2457 = vweird.f32 %v1938
    %vm2458 = vweird.f32 %v2452
    %vm2459 = vmor %vm2457, %vm2458
    %v2460 = vsel %vm2459, %v2452, %v2456
    %v2461 = vand.u32 2147483647, %v1938
    %vm2462 = vcmp.eq.f32.partialorder %v2461, 8.507059e+37
    %v2463 = vand.u32 %v1938, 2147483648
    %v2464 = vor.u32 1.1754944e-38, %v2463
    %v2465 = vsel %vm2462, %v2464, %v2460
    %v2466 = vmul.f32 %v1810, %v2465
    %v2467 = vrcp.pop %v1941
    %v2468 = vmul.f32 %v1941, %v2467
    %v2469 = vsub.f32 1.0, %v2468
    %v2470 = vmul.f32 %v2467, %v2469
    %v2471 = vadd.f32 %v2467, %v2470
    %vm2472 = vweird.f32 %v1941
    %vm2473 = vweird.f32 %v2467
    %vm2474 = vmor %vm2472, %vm2473
    %v2475 = vsel %vm2474, %v2467, %v2471
    %v2476 = vand.u32 2147483647, %v1941
    %vm2477 = vcmp.eq.f32.partialorder %v2476, 8.507059e+37
    %v2478 = vand.u32 %v1941, 2147483648
    %v2479 = vor.u32 1.1754944e-38, %v2478
    %v2480 = vsel %vm2477, %v2479, %v2475
    %v2481 = vmul.f32 %v1812, %v2480
    %v2482 = vrcp.pop %v1944
    %v2483 = vmul.f32 %v1944, %v2482
    %v2484 = vsub.f32 1.0, %v2483
    %v2485 = vmul.f32 %v2482, %v2484
    %v2486 = vadd.f32 %v2482, %v2485
    %vm2487 = vweird.f32 %v1944
    %vm2488 = vweird.f32 %v2482
    %vm2489 = vmor %vm2487, %vm2488
    %v2490 = vsel %vm2489, %v2482, %v2486
    %v2491 = vand.u32 2147483647, %v1944
    %vm2492 = vcmp.eq.f32.partialorder %v2491, 8.507059e+37
    %v2493 = vand.u32 %v1944, 2147483648
    %v2494 = vor.u32 1.1754944e-38, %v2493
    %v2495 = vsel %vm2492, %v2494, %v2490
    %v2496 = vmul.f32 %v1814, %v2495
    %v2497 = vrcp.pop %v1947
    %v2498 = vmul.f32 %v1947, %v2497
    %v2499 = vsub.f32 1.0, %v2498
    %v2500 = vmul.f32 %v2497, %v2499
    %v2501 = vadd.f32 %v2497, %v2500
    %vm2502 = vweird.f32 %v1947
    %vm2503 = vweird.f32 %v2497
    %vm2504 = vmor %vm2502, %vm2503
    %v2505 = vsel %vm2504, %v2497, %v2501
    %v2506 = vand.u32 2147483647, %v1947
    %vm2507 = vcmp.eq.f32.partialorder %v2506, 8.507059e+37
    %v2508 = vand.u32 %v1947, 2147483648
    %v2509 = vor.u32 1.1754944e-38, %v2508
    %v2510 = vsel %vm2507, %v2509, %v2505
    %v2511 = vmul.f32 %v1816, %v2510
    %v2512 = vrcp.pop %v1950
    %v2513 = vmul.f32 %v1950, %v2512
    %v2514 = vsub.f32 1.0, %v2513
    %v2515 = vmul.f32 %v2512, %v2514
    %v2516 = vadd.f32 %v2512, %v2515
    %vm2517 = vweird.f32 %v1950
    %vm2518 = vweird.f32 %v2512
    %vm2519 = vmor %vm2517, %vm2518
    %v2520 = vsel %vm2519, %v2512, %v2516
    %v2521 = vand.u32 2147483647, %v1950
    %vm2522 = vcmp.eq.f32.partialorder %v2521, 8.507059e+37
    %v2523 = vand.u32 %v1950, 2147483648
    %v2524 = vor.u32 1.1754944e-38, %v2523
    %v2525 = vsel %vm2522, %v2524, %v2520
    %v2526 = vmul.f32 %v1818, %v2525
    %v2527 = vrcp.pop %v1953
    %v2528 = vmul.f32 %v1953, %v2527
    %v2529 = vsub.f32 1.0, %v2528
    %v2530 = vmul.f32 %v2527, %v2529
    %v2531 = vadd.f32 %v2527, %v2530
    %vm2532 = vweird.f32 %v1953
    %vm2533 = vweird.f32 %v2527
    %vm2534 = vmor %vm2532, %vm2533
    %v2535 = vsel %vm2534, %v2527, %v2531
    %v2536 = vand.u32 2147483647, %v1953
    %vm2537 = vcmp.eq.f32.partialorder %v2536, 8.507059e+37
    %v2538 = vand.u32 %v1953, 2147483648
    %v2539 = vor.u32 1.1754944e-38, %v2538
    %v2540 = vsel %vm2537, %v2539, %v2535
    %v2541 = vmul.f32 %v1820, %v2540
    %v2542 = vrcp.pop %v1956
    %v2543 = vmul.f32 %v1956, %v2542
    %v2544 = vsub.f32 1.0, %v2543
    %v2545 = vmul.f32 %v2542, %v2544
    %v2546 = vadd.f32 %v2542, %v2545
    %vm2547 = vweird.f32 %v1956
    %vm2548 = vweird.f32 %v2542
    %vm2549 = vmor %vm2547, %vm2548
    %v2550 = vsel %vm2549, %v2542, %v2546
    %v2551 = vand.u32 2147483647, %v1956
    %vm2552 = vcmp.eq.f32.partialorder %v2551, 8.507059e+37
    %v2553 = vand.u32 %v1956, 2147483648
    %v2554 = vor.u32 1.1754944e-38, %v2553
    %v2555 = vsel %vm2552, %v2554, %v2550
    %v2556 = vmul.f32 %v1822, %v2555
    %v2557 = vrcp.pop %v1959
    %v2558 = vmul.f32 %v1959, %v2557
    %v2559 = vsub.f32 1.0, %v2558
    %v2560 = vmul.f32 %v2557, %v2559
    %v2561 = vadd.f32 %v2557, %v2560
    %vm2562 = vweird.f32 %v1959
    %vm2563 = vweird.f32 %v2557
    %vm2564 = vmor %vm2562, %vm2563
    %v2565 = vsel %vm2564, %v2557, %v2561
    %v2566 = vand.u32 2147483647, %v1959
    %vm2567 = vcmp.eq.f32.partialorder %v2566, 8.507059e+37
    %v2568 = vand.u32 %v1959, 2147483648
    %v2569 = vor.u32 1.1754944e-38, %v2568
    %v2570 = vsel %vm2567, %v2569, %v2565
    %v2571 = vmul.f32 %v1824, %v2570
    %v2572 = vrcp.pop %v1962
    %v2573 = vmul.f32 %v1962, %v2572
    %v2574 = vsub.f32 1.0, %v2573
    %v2575 = vmul.f32 %v2572, %v2574
    %v2576 = vadd.f32 %v2572, %v2575
    %vm2577 = vweird.f32 %v1962
    %vm2578 = vweird.f32 %v2572
    %vm2579 = vmor %vm2577, %vm2578
    %v2580 = vsel %vm2579, %v2572, %v2576
    %v2581 = vand.u32 2147483647, %v1962
    %vm2582 = vcmp.eq.f32.partialorder %v2581, 8.507059e+37
    %v2583 = vand.u32 %v1962, 2147483648
    %v2584 = vor.u32 1.1754944e-38, %v2583
    %v2585 = vsel %vm2582, %v2584, %v2580
    %v2586 = vmul.f32 %v1826, %v2585
    %v2587 = vrcp.pop %v1965
    %v2588 = vmul.f32 %v1965, %v2587
    %v2589 = vsub.f32 1.0, %v2588
    %v2590 = vmul.f32 %v2587, %v2589
    %v2591 = vadd.f32 %v2587, %v2590
    %vm2592 = vweird.f32 %v1965
    %vm2593 = vweird.f32 %v2587
    %vm2594 = vmor %vm2592, %vm2593
    %v2595 = vsel %vm2594, %v2587, %v2591
    %v2596 = vand.u32 2147483647, %v1965
    %vm2597 = vcmp.eq.f32.partialorder %v2596, 8.507059e+37
    %v2598 = vand.u32 %v1965, 2147483648
    %v2599 = vor.u32 1.1754944e-38, %v2598
    %v2600 = vsel %vm2597, %v2599, %v2595
    %v2601 = vmul.f32 %v1828, %v2600
    %v2602 = vrcp.pop %v1968
    %v2603 = vmul.f32 %v1968, %v2602
    %v2604 = vsub.f32 1.0, %v2603
    %v2605 = vmul.f32 %v2602, %v2604
    %v2606 = vadd.f32 %v2602, %v2605
    %vm2607 = vweird.f32 %v1968
    %vm2608 = vweird.f32 %v2602
    %vm2609 = vmor %vm2607, %vm2608
    %v2610 = vsel %vm2609, %v2602, %v2606
    %v2611 = vand.u32 2147483647, %v1968
    %vm2612 = vcmp.eq.f32.partialorder %v2611, 8.507059e+37
    %v2613 = vand.u32 %v1968, 2147483648
    %v2614 = vor.u32 1.1754944e-38, %v2613
    %v2615 = vsel %vm2612, %v2614, %v2610
    %v2616 = vmul.f32 %v1830, %v2615
    %v2617 = vrcp.pop %v1971
    %v2618 = vmul.f32 %v1971, %v2617
    %v2619 = vsub.f32 1.0, %v2618
    %v2620 = vmul.f32 %v2617, %v2619
    %v2621 = vadd.f32 %v2617, %v2620
    %vm2622 = vweird.f32 %v1971
    %vm2623 = vweird.f32 %v2617
    %vm2624 = vmor %vm2622, %vm2623
    %v2625 = vsel %vm2624, %v2617, %v2621
    %v2626 = vand.u32 2147483647, %v1971
    %vm2627 = vcmp.eq.f32.partialorder %v2626, 8.507059e+37
    %v2628 = vand.u32 %v1971, 2147483648
    %v2629 = vor.u32 1.1754944e-38, %v2628
    %v2630 = vsel %vm2627, %v2629, %v2625
    %v2631 = vmul.f32 %v1832, %v2630
    %v2632 = vrcp.pop %v1974
    %v2633 = vmul.f32 %v1974, %v2632
    %v2634 = vsub.f32 1.0, %v2633
    %v2635 = vmul.f32 %v2632, %v2634
    %v2636 = vadd.f32 %v2632, %v2635
    %vm2637 = vweird.f32 %v1974
    %vm2638 = vweird.f32 %v2632
    %vm2639 = vmor %vm2637, %vm2638
    %v2640 = vsel %vm2639, %v2632, %v2636
    %v2641 = vand.u32 2147483647, %v1974
    %vm2642 = vcmp.eq.f32.partialorder %v2641, 8.507059e+37
    %v2643 = vand.u32 %v1974, 2147483648
    %v2644 = vor.u32 1.1754944e-38, %v2643
    %v2645 = vsel %vm2642, %v2644, %v2640
    %v2646 = vmul.f32 %v1834, %v2645
    %v2647 = vrcp.pop %v1977
    %v2648 = vmul.f32 %v1977, %v2647
    %v2649 = vsub.f32 1.0, %v2648
    %v2650 = vmul.f32 %v2647, %v2649
    %v2651 = vadd.f32 %v2647, %v2650
    %vm2652 = vweird.f32 %v1977
    %vm2653 = vweird.f32 %v2647
    %vm2654 = vmor %vm2652, %vm2653
    %v2655 = vsel %vm2654, %v2647, %v2651
    %v2656 = vand.u32 2147483647, %v1977
    %vm2657 = vcmp.eq.f32.partialorder %v2656, 8.507059e+37
    %v2658 = vand.u32 %v1977, 2147483648
    %v2659 = vor.u32 1.1754944e-38, %v2658
    %v2660 = vsel %vm2657, %v2659, %v2655
    %v2661 = vmul.f32 %v1836, %v2660
    %v2662 = vrcp.pop %v1980
    %v2663 = vmul.f32 %v1980, %v2662
    %v2664 = vsub.f32 1.0, %v2663
    %v2665 = vmul.f32 %v2662, %v2664
    %v2666 = vadd.f32 %v2662, %v2665
    %vm2667 = vweird.f32 %v1980
    %vm2668 = vweird.f32 %v2662
    %vm2669 = vmor %vm2667, %vm2668
    %v2670 = vsel %vm2669, %v2662, %v2666
    %v2671 = vand.u32 2147483647, %v1980
    %vm2672 = vcmp.eq.f32.partialorder %v2671, 8.507059e+37
    %v2673 = vand.u32 %v1980, 2147483648
    %v2674 = vor.u32 1.1754944e-38, %v2673
    %v2675 = vsel %vm2672, %v2674, %v2670
    %v2676 = vmul.f32 %v1838, %v2675
    %v2677 = vrcp.pop %v1983
    %v2678 = vmul.f32 %v1983, %v2677
    %v2679 = vsub.f32 1.0, %v2678
    %v2680 = vmul.f32 %v2677, %v2679
    %v2681 = vadd.f32 %v2677, %v2680
    %vm2682 = vweird.f32 %v1983
    %vm2683 = vweird.f32 %v2677
    %vm2684 = vmor %vm2682, %vm2683
    %v2685 = vsel %vm2684, %v2677, %v2681
    %v2686 = vand.u32 2147483647, %v1983
    %vm2687 = vcmp.eq.f32.partialorder %v2686, 8.507059e+37
    %v2688 = vand.u32 %v1983, 2147483648
    %v2689 = vor.u32 1.1754944e-38, %v2688
    %v2690 = vsel %vm2687, %v2689, %v2685
    %v2691 = vmul.f32 %v1840, %v2690
    %v2692 = vrcp.pop %v1986
    %v2693 = vmul.f32 %v1986, %v2692
    %v2694 = vsub.f32 1.0, %v2693
    %v2695 = vmul.f32 %v2692, %v2694
    %v2696 = vadd.f32 %v2692, %v2695
    %vm2697 = vweird.f32 %v1986
    %vm2698 = vweird.f32 %v2692
    %vm2699 = vmor %vm2697, %vm2698
    %v2700 = vsel %vm2699, %v2692, %v2696
    %v2701 = vand.u32 2147483647, %v1986
    %vm2702 = vcmp.eq.f32.partialorder %v2701, 8.507059e+37
    %v2703 = vand.u32 %v1986, 2147483648
    %v2704 = vor.u32 1.1754944e-38, %v2703
    %v2705 = vsel %vm2702, %v2704, %v2700
    %v2706 = vmul.f32 %v1842, %v2705
    %2707 = vst.msk [vmem:[%s6] sm:$0xff] %vm1554, %v2001
    %2708 = vst.msk [vmem:[%s6 + $0x8] sm:$0xff] %vm1554, %v2016
    %2709 = vst.msk [vmem:[%s6 + $0x10] sm:$0xff] %vm1554, %v2031
    %2710 = vst.msk [vmem:[%s6 + $0x18] sm:$0xff] %vm1554, %v2046
    %2711 = vst.msk [vmem:[%s6 + $0x20] sm:$0xff] %vm1554, %v2061
    %2712 = vst.msk [vmem:[%s6 + $0x28] sm:$0xff] %vm1554, %v2076
    %2713 = vst.msk [vmem:[%s6 + $0x30] sm:$0xff] %vm1554, %v2091
    %2714 = vst.msk [vmem:[%s6 + $0x38] sm:$0xff] %vm1554, %v2106
    %2715 = vst.msk [vmem:[%s6 + $0x40] sm:$0xff] %vm1554, %v2121
    %2716 = vst.msk [vmem:[%s6 + $0x48] sm:$0xff] %vm1554, %v2136
    %2717 = vst.msk [vmem:[%s6 + $0x50] sm:$0xff] %vm1554, %v2151
    %2718 = vst.msk [vmem:[%s6 + $0x58] sm:$0xff] %vm1554, %v2166
    %2719 = vst.msk [vmem:[%s6 + $0x60] sm:$0xff] %vm1554, %v2181
    %2720 = vst.msk [vmem:[%s6 + $0x68] sm:$0xff] %vm1554, %v2196
    %2721 = vst.msk [vmem:[%s6 + $0x70] sm:$0xff] %vm1554, %v2211
    %2722 = vst.msk [vmem:[%s6 + $0x78] sm:$0xff] %vm1554, %v2226
    %2723 = vst.msk [vmem:[%s6 + $0x80] sm:$0xff] %vm1554, %v2241
    %2724 = vst.msk [vmem:[%s6 + $0x88] sm:$0xff] %vm1554, %v2256
    %2725 = vst.msk [vmem:[%s6 + $0x90] sm:$0xff] %vm1554, %v2271
    %2726 = vst.msk [vmem:[%s6 + $0x98] sm:$0xff] %vm1554, %v2286
    %2727 = vst.msk [vmem:[%s6 + $0xa0] sm:$0xff] %vm1554, %v2301
    %2728 = vst.msk [vmem:[%s6 + $0xa8] sm:$0xff] %vm1554, %v2316
    %2729 = vst.msk [vmem:[%s6 + $0xb0] sm:$0xff] %vm1554, %v2331
    %2730 = vst.msk [vmem:[%s6 + $0xb8] sm:$0xff] %vm1554, %v2346
    %2731 = vst.msk [vmem:[%s6 + $0xc0] sm:$0xff] %vm1554, %v2361
    %2732 = vst.msk [vmem:[%s6 + $0xc8] sm:$0xff] %vm1554, %v2376
    %2733 = vst.msk [vmem:[%s6 + $0xd0] sm:$0xff] %vm1554, %v2391
    %2734 = vst.msk [vmem:[%s6 + $0xd8] sm:$0xff] %vm1554, %v2406
    %2735 = vst.msk [vmem:[%s6 + $0xe0] sm:$0xff] %vm1554, %v2421
    %2736 = vst.msk [vmem:[%s6 + $0xe8] sm:$0xff] %vm1554, %v2436
    %2737 = vst.msk [vmem:[%s6 + $0xf0] sm:$0xff] %vm1554, %v2451
    %2738 = vst.msk [vmem:[%s6 + $0xf8] sm:$0xff] %vm1554, %v2466
    %2739 = vst.msk [vmem:[%s6 + $0x100] sm:$0xff] %vm1554, %v2481
    %2740 = vst.msk [vmem:[%s6 + $0x108] sm:$0xff] %vm1554, %v2496
    %2741 = vst.msk [vmem:[%s6 + $0x110] sm:$0xff] %vm1554, %v2511
    %2742 = vst.msk [vmem:[%s6 + $0x118] sm:$0xff] %vm1554, %v2526
    %2743 = vst.msk [vmem:[%s6 + $0x120] sm:$0xff] %vm1554, %v2541
    %2744 = vst.msk [vmem:[%s6 + $0x128] sm:$0xff] %vm1554, %v2556
    %2745 = vst.msk [vmem:[%s6 + $0x130] sm:$0xff] %vm1554, %v2571
    %2746 = vst.msk [vmem:[%s6 + $0x138] sm:$0xff] %vm1554, %v2586
    %2747 = vst.msk [vmem:[%s6 + $0x140] sm:$0xff] %vm1554, %v2601
    %2748 = vst.msk [vmem:[%s6 + $0x148] sm:$0xff] %vm1554, %v2616
    %2749 = vst.msk [vmem:[%s6 + $0x150] sm:$0xff] %vm1554, %v2631
    %2750 = vst.msk [vmem:[%s6 + $0x158] sm:$0xff] %vm1554, %v2646
    %2751 = vst.msk [vmem:[%s6 + $0x160] sm:$0xff] %vm1554, %v2661
    %2752 = vst.msk [vmem:[%s6 + $0x168] sm:$0xff] %vm1554, %v2676
    %2753 = vst.msk [vmem:[%s6 + $0x170] sm:$0xff] %vm1554, %v2691
    %2754 = vst.msk [vmem:[%s6 + $0x178] sm:$0xff] %vm1554, %v2706
    // Predicated region
    $region22: #{tpu_custom_call.1} parent=1 // pred_check
      _
    $region23: #{tpu_custom_call.1} parent=1 // pred_check_branch
      %2756 = sbr.rel (0) target = $region25
    $region24: #{tpu_custom_call.1} parent=1 // pred_region
      %2758 = vsyncadd [#allocation3], 0
      %s2759 = sshll.u32 [#allocation2], 4
      %s2760 = int_to_ptr.vmem [resolvable:$true] %s2759
      %s2761 = sshll.u32 %s5, 4
      %s2762 = int_to_ptr.hbm [resolvable:$true] %s2761
      %2767 = dma.vmem_to_hbm [thread:$0]  %s2760, 12288, %s2762, [#allocation3], 256, 256, 16
    $region25: #{tpu_custom_call.1} parent=1 // pred_fallthru
      _
    // Predicated region
    $region26: #{tpu_custom_call.1} parent=1 // pred_check
      _
    $region27: #{tpu_custom_call.1} parent=1 // pred_check_branch
      %2769 = sbr.rel (0) target = $region29
    $region28: #{tpu_custom_call.1} parent=1 // pred_region
      _
    $region29: #{tpu_custom_call.1} parent=1 // pred_fallthru
      _
    // Predicated region
    $region30: #{tpu_custom_call.1} parent=1 // pred_check
      _
    $region31: #{tpu_custom_call.1} parent=1 // pred_check_branch
      %2771 = sbr.rel (0) target = $region33
    $region32: #{tpu_custom_call.1} parent=1 // pred_region
      %2773 = dma.done [#allocation3], 12288
    $region33: #{tpu_custom_call.1} parent=1 // pred_fallthru
      _
    // Predicated region
    $region34: #{tpu_custom_call.1} parent=1 // pred_check
      _
    $region35: #{tpu_custom_call.1} parent=1 // pred_check_branch
      %2775 = sbr.rel (0) target = $region37
    $region36: #{tpu_custom_call.1} parent=1 // pred_region
      _
    $region37: #{tpu_custom_call.1} parent=1 // pred_fallthru
      _
    %2776 = vsyncpa [#allocation3], 1

</llo_original>
